<compile_context>
chip_gen: v6e
topology: v6e:2x2x1
jax: 0.10.0
libtpu: 0.0.40
codegen_flags: <defaults>
</compile_context>

<pallas_src>
import jax
import jax.numpy as jnp
from jax import lax
from jax.experimental import pallas as pl
from jax.experimental.pallas import tpu as pltpu

block_size = 256          # max context (only tril[:T, :T] is used)
dropout_p = 0.2           # nn.Dropout(0.2); identity in eval mode (see TODO)
n_embed = 128             # C
head_size = 32            # H


def _head_kernel(x_ref, wq_ref, wk_ref, wv_ref, o_ref):
    # x_ref : (1, T, C) f32   one batch element's activations
    # wq_ref: (C, H)    bf16  Wq^T * C**-0.5 (scale folded in)
    # wk_ref: (C, H)    bf16  Wk^T
    # wv_ref: (C, H)    bf16  Wv^T
    # o_ref : (1, T, H)
    x = x_ref[0].astype(jnp.bfloat16)                                   # (T, C)

    # project once per batch element (three narrow dots; no lane-unaligned slicing)
    q = jnp.dot(x, wq_ref[...], preferred_element_type=jnp.float32)     # (T, H), pre-scaled
    k = jnp.dot(x, wk_ref[...], preferred_element_type=jnp.float32)     # (T, H)
    v = jnp.dot(x, wv_ref[...], preferred_element_type=jnp.float32)     # (T, H)

    # scores: contract last dims of q and k — no explicit transpose of k
    s = lax.dot_general(q.astype(jnp.bfloat16), k.astype(jnp.bfloat16),
                        dimension_numbers=(((1,), (1,)), ((), ())),
                        preferred_element_type=jnp.float32)              # (T, T)

    # causal mask from thin iotas (broadcast, no (T,T) iota materialized)
    T = s.shape[0]
    row = lax.broadcasted_iota(jnp.int32, (T, 1), 0)
    col = lax.broadcasted_iota(jnp.int32, (1, T), 1)
    s = jnp.where(row >= col, s, -jnp.inf)

    # single masked softmax (f32), exact normalization
    m = jnp.max(s, axis=-1, keepdims=True)
    p = jnp.exp(s - m)
    l = jnp.sum(p, axis=-1, keepdims=True)

    # TODO(synk): nn.Dropout(0.2) on the attention weights is identity in eval
    # mode; training-mode stochastic dropout (pltpu.prng_seed + random bits)
    # is not applied here.

    acc = jnp.dot(p.astype(jnp.bfloat16), v.astype(jnp.bfloat16),
                  preferred_element_type=jnp.float32)                    # (T, H)
    o_ref[0] = (acc / l).astype(o_ref.dtype)


def head_forward(x, w_key, w_query, w_value):
    """Single-head causal self-attention (eval mode).

    x:        (B, T, C) float32
    w_key, w_query, w_value: nn.Linear weights of shape (H, C)
    returns:  (B, T, H) float32
    """
    B, T, C = x.shape
    H = w_key.shape[0]
    assert w_key.shape == (H, C) and w_query.shape == (H, C) and w_value.shape == (H, C)
    assert T % 8 == 0, "T must be sublane (8) aligned"
    # One-shot per batch element: (T,T) f32 score tile must fit VMEM comfortably.
    assert T <= 2048, "use flash tiling for large T (see TODO at top of file)"

    scale = C ** (-0.5)                                     # matches the module: n_embed**-0.5
    wq = (w_query.T * scale).astype(jnp.bfloat16)           # (C, H)
    wk = w_key.T.astype(jnp.bfloat16)                       # (C, H)
    wv = w_value.T.astype(jnp.bfloat16)                     # (C, H)

    return pl.pallas_call(
        _head_kernel,
        out_shape=jax.ShapeDtypeStruct((B, T, H), x.dtype),
        grid_spec=pltpu.PrefetchScalarGridSpec(
            num_scalar_prefetch=0,
            grid=(B,),                                       # one step per batch element
            in_specs=[
                pl.BlockSpec((1, T, C), lambda b: (b, 0, 0)),    # x (passed once)
                pl.BlockSpec((C, H), lambda b: (0, 0)),          # Wq^T * scale
                pl.BlockSpec((C, H), lambda b: (0, 0)),          # Wk^T
                pl.BlockSpec((C, H), lambda b: (0, 0)),          # Wv^T
            ],
            out_specs=pl.BlockSpec((1, T, H), lambda b: (b, 0, 0)),
        ),
        compiler_params=pltpu.CompilerParams(
            dimension_semantics=("parallel",)),              # v7x: 2 TCs split the batch
    )(x, wq, wk, wv)


def _reference(x, w_key, w_query, w_value):
    """Pure-JAX f32 reference matching the PyTorch forward (eval mode)."""
    B, T, C = x.shape
    k = x @ w_key.T
    q = x @ w_query.T
    v = x @ w_value.T
    wei = (q @ jnp.swapaxes(k, -2, -1)) * C ** (-0.5)
    mask = jnp.tril(jnp.ones((T, T), bool))
    wei = jnp.where(mask[None], wei, -jnp.inf)
    wei = jax.nn.softmax(wei, axis=-1)
    return wei @ v


if __name__ == "__main__":
    B, T, C, H = 2, block_size, n_embed, head_size

    key = jax.random.PRNGKey(0)
    kx, kk, kq, kv = jax.random.split(key, 4)

    x = jax.random.normal(kx, (B, T, C), dtype=jnp.float32)
    # deterministic init matching nn.Linear(n_embed, head_size, bias=False)
    bound = 1.0 / (C ** 0.5)
    w_key = jax.random.uniform(kk, (H, C), jnp.float32, -bound, bound)
    w_query = jax.random.uniform(kq, (H, C), jnp.float32, -bound, bound)
    w_value = jax.random.uniform(kv, (H, C), jnp.float32, -bound, bound)

    out = head_forward(x, w_key, w_query, w_value)
    out = jax.block_until_ready(out)

    ref = _reference(x, w_key, w_query, w_value)
    assert out.shape == (B, T, H)
    # bf16 MXU inputs (f32 accumulation) -> loose-but-safe tolerance vs f32 reference
    assert jnp.allclose(out, ref, atol=2e-2, rtol=2e-2), "mismatch vs reference"

    print("KERNEL_OK")
</pallas_src>

<mosaic_0001>
module attributes {stable_mosaic.version = 11 : i64} {
  func.func @_head_kernel(%arg0: i32, %arg1: memref<1x256x128xf32, #tpu.memory_space<vmem>>, %arg2: memref<128x32xbf16, #tpu.memory_space<vmem>>, %arg3: memref<128x32xbf16, #tpu.memory_space<vmem>>, %arg4: memref<128x32xbf16, #tpu.memory_space<vmem>>, %arg5: memref<1x256x32xf32, #tpu.memory_space<vmem>>) attributes {dimension_semantics = [#tpu.dimension_semantics<parallel>], iteration_bounds = array<i64: 2>, scalar_prefetch = 0 : i64, scratch_operands = 0 : i64, tpu.core_type = #tpu.core_type<tc>, window_params = [{transform_indices = @transform_0, window_bounds = array<i64: 1, 256, 128>}, {pipeline_mode = #tpu.pipeline_mode<synchronous>, transform_indices = @transform_1, window_bounds = array<i64: 128, 32>}, {pipeline_mode = #tpu.pipeline_mode<synchronous>, transform_indices = @transform_2, window_bounds = array<i64: 128, 32>}, {pipeline_mode = #tpu.pipeline_mode<synchronous>, transform_indices = @transform_3, window_bounds = array<i64: 128, 32>}, {transform_indices = @transform_4, window_bounds = array<i64: 1, 256, 32>}]} {
    %c0 = arith.constant 0 : index
    %c0_0 = arith.constant 0 : index
    %c0_1 = arith.constant 0 : index
    %0 = vector.load %arg1[%c0, %c0_0, %c0_1] : memref<1x256x128xf32, #tpu.memory_space<vmem>>, vector<1x256x128xf32>
    %1 = vector.shape_cast %0 : vector<1x256x128xf32> to vector<256x128xf32>
    %2 = arith.truncf %1 : vector<256x128xf32> to vector<256x128xbf16>
    %c0_2 = arith.constant 0 : index
    %c0_3 = arith.constant 0 : index
    %3 = vector.load %arg2[%c0_2, %c0_3] : memref<128x32xbf16, #tpu.memory_space<vmem>>, vector<128x32xbf16>
    %cst = arith.constant dense<0.000000e+00> : vector<256x32xf32>
    %4 = tpu.matmul %2, %3, %cst {dimension_numbers = #tpu.dot_dimension_numbers<[1], [0], [0], [1], [0, 0, 1, 1], [], []>} : vector<256x128xbf16>, vector<128x32xbf16>, vector<256x32xf32> -> vector<256x32xf32>
    %c0_4 = arith.constant 0 : index
    %c0_5 = arith.constant 0 : index
    %5 = vector.load %arg3[%c0_4, %c0_5] : memref<128x32xbf16, #tpu.memory_space<vmem>>, vector<128x32xbf16>
    %cst_6 = arith.constant dense<0.000000e+00> : vector<256x32xf32>
    %6 = tpu.matmul %2, %5, %cst_6 {dimension_numbers = #tpu.dot_dimension_numbers<[1], [0], [0], [1], [0, 0, 1, 1], [], []>} : vector<256x128xbf16>, vector<128x32xbf16>, vector<256x32xf32> -> vector<256x32xf32>
    %c0_7 = arith.constant 0 : index
    %c0_8 = arith.constant 0 : index
    %7 = vector.load %arg4[%c0_7, %c0_8] : memref<128x32xbf16, #tpu.memory_space<vmem>>, vector<128x32xbf16>
    %cst_9 = arith.constant dense<0.000000e+00> : vector<256x32xf32>
    %8 = tpu.matmul %2, %7, %cst_9 {dimension_numbers = #tpu.dot_dimension_numbers<[1], [0], [0], [1], [0, 0, 1, 1], [], []>} : vector<256x128xbf16>, vector<128x32xbf16>, vector<256x32xf32> -> vector<256x32xf32>
    %9 = arith.truncf %4 : vector<256x32xf32> to vector<256x32xbf16>
    %10 = arith.truncf %6 : vector<256x32xf32> to vector<256x32xbf16>
    %cst_10 = arith.constant dense<0.000000e+00> : vector<256x256xf32>
    %11 = tpu.matmul %9, %10, %cst_10 {dimension_numbers = #tpu.dot_dimension_numbers<[1], [1], [0], [0], [0, 0, 1, 0], [], []>} : vector<256x32xbf16>, vector<256x32xbf16>, vector<256x256xf32> -> vector<256x256xf32>
    %12 = tpu.iota {dimensions = array<i32: 0>} : vector<256x1xi32>
    %13 = tpu.iota {dimensions = array<i32: 1>} : vector<1x256xi32>
    %14 = vector.broadcast %12 : vector<256x1xi32> to vector<256x256xi32>
    %15 = vector.broadcast %13 : vector<1x256xi32> to vector<256x256xi32>
    %16 = arith.cmpi sge, %14, %15 : vector<256x256xi32>
    %cst_11 = arith.constant 0xFF800000 : f32
    %17 = vector.broadcast %cst_11 : f32 to vector<256x256xf32>
    %18 = arith.select %16, %11, %17 : vector<256x256xi1>, vector<256x256xf32>
    %cst_12 = arith.constant dense<0xFF800000> : vector<256xf32>
    %19 = vector.multi_reduction <maximumf>, %18, %cst_12 [1] : vector<256x256xf32> to vector<256xf32>
    %20 = vector.shape_cast %19 : vector<256xf32> to vector<256x1xf32>
    %21 = vector.broadcast %20 : vector<256x1xf32> to vector<256x256xf32>
    %22 = arith.subf %18, %21 : vector<256x256xf32>
    %23 = math.exp %22 : vector<256x256xf32>
    %cst_13 = arith.constant dense<0.000000e+00> : vector<256xf32>
    %24 = vector.multi_reduction <add>, %23, %cst_13 [1] : vector<256x256xf32> to vector<256xf32>
    %25 = vector.shape_cast %24 : vector<256xf32> to vector<256x1xf32>
    %26 = arith.truncf %23 : vector<256x256xf32> to vector<256x256xbf16>
    %27 = arith.truncf %8 : vector<256x32xf32> to vector<256x32xbf16>
    %cst_14 = arith.constant dense<0.000000e+00> : vector<256x32xf32>
    %28 = tpu.matmul %26, %27, %cst_14 {dimension_numbers = #tpu.dot_dimension_numbers<[1], [0], [0], [1], [0, 0, 1, 1], [], []>} : vector<256x256xbf16>, vector<256x32xbf16>, vector<256x32xf32> -> vector<256x32xf32>
    %29 = vector.broadcast %25 : vector<256x1xf32> to vector<256x32xf32>
    %30 = arith.divf %28, %29 : vector<256x32xf32>
    %c0_15 = arith.constant 0 : index
    %c0_16 = arith.constant 0 : index
    %c0_17 = arith.constant 0 : index
    %31 = vector.load %arg5[%c0_15, %c0_16, %c0_17] : memref<1x256x32xf32, #tpu.memory_space<vmem>>, vector<1x256x32xf32>
    %32 = vector.shape_cast %31 : vector<1x256x32xf32> to vector<256x32xf32>
    %33 = vector.shape_cast %30 : vector<256x32xf32> to vector<1x256x32xf32>
    tpu.vector_store %arg5[%c0_15, %c0_16, %c0_17], %33 {strides = array<i32>} : memref<1x256x32xf32, #tpu.memory_space<vmem>>, vector<1x256x32xf32>,
    return
  }
  func.func @transform_0(%arg0: i32) -> (i32, i32, i32) {
    %c0_i32 = arith.constant 0 : i32
    %c0_i32_0 = arith.constant 0 : i32
    %c0_i32_1 = arith.constant 0 : i32
    return %arg0, %c0_i32, %c0_i32_0 : i32, i32, i32
  }
  func.func @transform_1(%arg0: i32) -> (i32, i32) {
    %c0_i32 = arith.constant 0 : i32
    %c0_i32_0 = arith.constant 0 : i32
    %c0_i32_1 = arith.constant 0 : i32
    return %c0_i32, %c0_i32_0 : i32, i32
  }
  func.func @transform_2(%arg0: i32) -> (i32, i32) {
    %c0_i32 = arith.constant 0 : i32
    %c0_i32_0 = arith.constant 0 : i32
    %c0_i32_1 = arith.constant 0 : i32
    return %c0_i32, %c0_i32_0 : i32, i32
  }
  func.func @transform_3(%arg0: i32) -> (i32, i32) {
    %c0_i32 = arith.constant 0 : i32
    %c0_i32_0 = arith.constant 0 : i32
    %c0_i32_1 = arith.constant 0 : i32
    return %c0_i32, %c0_i32_0 : i32, i32
  }
  func.func @transform_4(%arg0: i32) -> (i32, i32, i32) {
    %c0_i32 = arith.constant 0 : i32
    %c0_i32_0 = arith.constant 0 : i32
    %c0_i32_1 = arith.constant 0 : i32
    return %arg0, %c0_i32, %c0_i32_0 : i32, i32, i32
  }
}

</mosaic_0001>

<llo_original>
// kernel: tpu_custom_call.1
$region0: #{tpu_custom_call.1}
  #allocation0 [shape = 'u32[]', space=smem, size = 0x4, offset = 0x4, fixed_abs, tag = 'smem constant byte address 0x4 - core index']
  #allocation1 [shape = 'u32[144,128]{1,0:T(1,128)}', space=vmem, size = 0x12000, scoped, tag = 'internal scratch']
  %s0 = inlined_call_operand.hbm [shape: f32[2,256,128], index: 0, kind: input, shape index: {}]
  %s1 = inlined_call_operand.vmem [shape: bf16[128,32], index: 1, kind: input, shape index: {}]
  %s2 = inlined_call_operand.vmem [shape: bf16[128,32], index: 2, kind: input, shape index: {}]
  %s3 = inlined_call_operand.vmem [shape: bf16[128,32], index: 3, kind: input, shape index: {}]
  %s4 = inlined_call_operand.vmem [shape: f32[2,256,32], index: 4, kind: output, shape index: {}]
  %s5 = sld [smem:[#allocation0]]
  $region53: #{tpu_custom_call.1} parent=0
    _
  %s7 = ssub.s32 1, %s5
  %s8 = scalar_select 0, %s7, %s5
  $region1: #{tpu_custom_call.1} parent=0
    #allocation2 [shape = 'u8[262144]{0}', space=vmem, size = 0x40000, scoped, tag = 'input window, operand 0']
    #allocation3 [shape = 's32[2]{0}', space=sflag, size = 0x8, scoped, tag = 'scoped memory for tpu_custom_call.1']
    %9 = vsyncpa [#allocation3], 0
    %s10 = scalar_lea.sflag [#allocation3], 1
    %11 = vsyncpa %s10, 0
    loop: start=0, step=1, limit=4
    $region2: #{tpu_custom_call.1} parent=1 // loop_pre_header
      _
    $region3: #{tpu_custom_call.1} parent=1 // loop_header
      %s13 = sphi 0, %s17
      %p14 = scmp.ge.s32.totalorder %s13, 4
      %s23 = sphi 0, %s25
      %s26 = sphi 0, %s23
      %s27 = sphi 0, %s26
      %s43 = sphi 0, %s27
      %s47 = sphi 0, %s47
      %s49 = sphi 0, %s47
      %s50 = sphi 0, %s49
      %s64 = sphi 0, %s50
      %s68 = sphi 0, %s68
      %s70 = sphi 0, %s68
      %s71 = sphi 0, %s70
      %s85 = sphi 0, %s71
      %s89 = sphi 0, %s89
      %s91 = sphi 0, %s89
      %s92 = sphi 0, %s91
      %s106 = sphi 0, %s92
      %s112 = sphi 0, %s114
      %s115 = sphi 0, %s112
      %s116 = sphi 0, %s115
      %s132 = sphi 0, %s116
    $region4: #{tpu_custom_call.1} parent=1 // loop_header_branch
      %16 = sbr.rel (%p14) target = $region8
    $region5: #{tpu_custom_call.1} parent=1 // loop_body
      %s18 = ssub.s32 %s13, 1
      %s19 = ssub.s32 %s13, 2
      %s20 = sadd.s32 %s13, 1
      %s21 = ssub.s32 %s13, %s20
      %p22 = scmp.eq.s32.totalorder %s21, 0
      %s24 = sadd.s32 %s23, 1
      %s25 = scalar_select %p22, %s23, %s24
      %p28 = pneg %p22
      %p29 = scmp.eq.s32.totalorder %s13, 1
      %p30 = por %p28, %p29
      %p31 = scmp.ne.s32.totalorder %s23, %s26
      %p32 = scmp.eq.s32.totalorder %s13, 0
      %p33 = por %p31, %p32
      %p34 = scmp.ne.s32.totalorder %s23, %s26
      %p35 = scmp.eq.s32.totalorder %s18, 1
      %p36 = por %p34, %p35
      %p37 = scmp.ne.s32.totalorder %s26, %s27
      %p38 = scmp.eq.s32.totalorder %s18, 0
      %p39 = por %p37, %p38
      %p40 = scmp.ne.s32.totalorder %s26, %s27
      %p41 = scmp.eq.s32.totalorder %s19, 1
      %p42 = por %p40, %p41
      %p44 = scmp.ne.s32.totalorder %s27, %s43
      %p45 = scmp.eq.s32.totalorder %s19, 0
      %p46 = por %p44, %p45
      %s48 = sadd.s32 %s47, 1
      %p51 = scmp.eq.s32.totalorder %s13, 1
      %p52 = scmp.ne.s32.totalorder %s47, %s49
      %p53 = scmp.eq.s32.totalorder %s13, 0
      %p54 = por %p52, %p53
      %p55 = scmp.ne.s32.totalorder %s47, %s49
      %p56 = scmp.eq.s32.totalorder %s18, 1
      %p57 = por %p55, %p56
      %p58 = scmp.ne.s32.totalorder %s49, %s50
      %p59 = scmp.eq.s32.totalorder %s18, 0
      %p60 = por %p58, %p59
      %p61 = scmp.ne.s32.totalorder %s49, %s50
      %p62 = scmp.eq.s32.totalorder %s19, 1
      %p63 = por %p61, %p62
      %p65 = scmp.ne.s32.totalorder %s50, %s64
      %p66 = scmp.eq.s32.totalorder %s19, 0
      %p67 = por %p65, %p66
      %s69 = sadd.s32 %s68, 1
      %p72 = scmp.eq.s32.totalorder %s13, 1
      %p73 = scmp.ne.s32.totalorder %s68, %s70
      %p74 = scmp.eq.s32.totalorder %s13, 0
      %p75 = por %p73, %p74
      %p76 = scmp.ne.s32.totalorder %s68, %s70
      %p77 = scmp.eq.s32.totalorder %s18, 1
      %p78 = por %p76, %p77
      %p79 = scmp.ne.s32.totalorder %s70, %s71
      %p80 = scmp.eq.s32.totalorder %s18, 0
      %p81 = por %p79, %p80
      %p82 = scmp.ne.s32.totalorder %s70, %s71
      %p83 = scmp.eq.s32.totalorder %s19, 1
      %p84 = por %p82, %p83
      %p86 = scmp.ne.s32.totalorder %s71, %s85
      %p87 = scmp.eq.s32.totalorder %s19, 0
      %p88 = por %p86, %p87
      %s90 = sadd.s32 %s89, 1
      %p93 = scmp.eq.s32.totalorder %s13, 1
      %p94 = scmp.ne.s32.totalorder %s89, %s91
      %p95 = scmp.eq.s32.totalorder %s13, 0
      %p96 = por %p94, %p95
      %p97 = scmp.ne.s32.totalorder %s89, %s91
      %p98 = scmp.eq.s32.totalorder %s18, 1
      %p99 = por %p97, %p98
      %p100 = scmp.ne.s32.totalorder %s91, %s92
      %p101 = scmp.eq.s32.totalorder %s18, 0
      %p102 = por %p100, %p101
      %p103 = scmp.ne.s32.totalorder %s91, %s92
      %p104 = scmp.eq.s32.totalorder %s19, 1
      %p105 = por %p103, %p104
      %p107 = scmp.ne.s32.totalorder %s92, %s106
      %p108 = scmp.eq.s32.totalorder %s19, 0
      %p109 = por %p107, %p108
      %s110 = ssub.s32 %s13, %s20
      %p111 = scmp.eq.s32.totalorder %s110, 0
      %s113 = sadd.s32 %s112, 1
      %s114 = scalar_select %p111, %s112, %s113
      %p117 = pneg %p111
      %p118 = scmp.eq.s32.totalorder %s13, 1
      %p119 = por %p117, %p118
      %p120 = scmp.ne.s32.totalorder %s112, %s115
      %p121 = scmp.eq.s32.totalorder %s13, 0
      %p122 = por %p120, %p121
      %p123 = scmp.ne.s32.totalorder %s112, %s115
      %p124 = scmp.eq.s32.totalorder %s18, 1
      %p125 = por %p123, %p124
      %p126 = scmp.ne.s32.totalorder %s115, %s116
      %p127 = scmp.eq.s32.totalorder %s18, 0
      %p128 = por %p126, %p127
      %p129 = scmp.ne.s32.totalorder %s115, %s116
      %p130 = scmp.eq.s32.totalorder %s19, 1
      %p131 = por %p129, %p130
      %p133 = scmp.ne.s32.totalorder %s116, %s132
      %p134 = scmp.eq.s32.totalorder %s19, 0
      %p135 = por %p133, %p134
      %p136 = scmp.le.s32.totalorder 1, %s13
      %p137 = scmp.lt.s32.totalorder %s13, 3
      %p138 = pnand %p136, %p137
      %p139 = pneg %p138
      // Predicated region
      $region9: #{tpu_custom_call.1} parent=5 // pred_check
        _
      $region10: #{tpu_custom_call.1} parent=5 // pred_check_branch
        %141 = sbr.rel (%p138) target = $region12
      $region11: #{tpu_custom_call.1} parent=5 // pred_region
        %s142 = ssub.s32 %s13, 1
        // Predicated region
        $region13: #{tpu_custom_call.1} parent=11 // pred_check
          %p143 = pneg %p60
        $region14: #{tpu_custom_call.1} parent=11 // pred_check_branch
          %145 = sbr.rel (%p143) target = $region16
        $region15: #{tpu_custom_call.1} parent=11 // pred_region
          _
        $region16: #{tpu_custom_call.1} parent=11 // pred_fallthru
          _
        // Predicated region
        $region17: #{tpu_custom_call.1} parent=11 // pred_check
          %p146 = pneg %p81
        $region18: #{tpu_custom_call.1} parent=11 // pred_check_branch
          %148 = sbr.rel (%p146) target = $region20
        $region19: #{tpu_custom_call.1} parent=11 // pred_region
          _
        $region20: #{tpu_custom_call.1} parent=11 // pred_fallthru
          _
        // Predicated region
        $region21: #{tpu_custom_call.1} parent=11 // pred_check
          %p149 = pneg %p102
        $region22: #{tpu_custom_call.1} parent=11 // pred_check_branch
          %151 = sbr.rel (%p149) target = $region24
        $region23: #{tpu_custom_call.1} parent=11 // pred_region
          _
        $region24: #{tpu_custom_call.1} parent=11 // pred_fallthru
          _
      $region12: #{tpu_custom_call.1} parent=5 // pred_fallthru
        _
      %p152 = scmp.lt.s32.totalorder %s13, 2
      // Predicated region
      $region25: #{tpu_custom_call.1} parent=5 // pred_check
        %p153 = pneg %p152
      $region26: #{tpu_custom_call.1} parent=5 // pred_check_branch
        %155 = sbr.rel (%p153) target = $region28
      $region27: #{tpu_custom_call.1} parent=5 // pred_region
        // Predicated region
        $region29: #{tpu_custom_call.1} parent=27 // pred_check
          %p156 = pneg %p33
        $region30: #{tpu_custom_call.1} parent=27 // pred_check_branch
          %158 = sbr.rel (%p156) target = $region32
        $region31: #{tpu_custom_call.1} parent=27 // pred_region
          %s159 = sand.u32 %s23, 1
          %s160 = scalar_lea.sflag [#allocation3], %s159
          %s161 = sand.u32 %s23, 1
          %s162 = smul.addr %s161, 256
          %s163 = scalar_lea.vmem [#allocation2], %s162
          %s165 = ssub.s32 4096, 4096
          %166 = vsyncadd %s160, %s165
          %s167 = smul.addr %s13, 32
          %s168 = smul.addr %s167, 128
          %s169 = scalar_lea.hbm %s0, %s168
          %s170 = sshll.u32 %s163, 4
          %s171 = int_to_ptr.vmem [resolvable:$true] %s170
          %176 = dma.hbm_to_vmem [thread:$0]  %s169, 4096, %s171, %s160, 128, 128, 8
        $region32: #{tpu_custom_call.1} parent=27 // pred_fallthru
          _
      $region28: #{tpu_custom_call.1} parent=5 // pred_fallthru
        _
      %p177 = scmp.le.s32.totalorder 1, %s13
      %p178 = scmp.lt.s32.totalorder %s13, 3
      %p179 = pnand %p177, %p178
      %p180 = pneg %p179
      // Predicated region
      $region33: #{tpu_custom_call.1} parent=5 // pred_check
        _
      $region34: #{tpu_custom_call.1} parent=5 // pred_check_branch
        %182 = sbr.rel (%p179) target = $region36
      $region35: #{tpu_custom_call.1} parent=5 // pred_region
        %s183 = ssub.s32 %s13, 1
        %s184 = sand.u32 %s26, 1
        %s185 = scalar_lea.sflag [#allocation3], %s184
        %s186 = sand.u32 %s26, 1
        %s187 = smul.addr %s186, 256
        %s188 = scalar_lea.vmem [#allocation2], %s187
        // Predicated region
        $region37: #{tpu_custom_call.1} parent=35 // pred_check
          %p189 = pneg %p39
        $region38: #{tpu_custom_call.1} parent=35 // pred_check_branch
          %191 = sbr.rel (%p189) target = $region40
        $region39: #{tpu_custom_call.1} parent=35 // pred_region
          %192 = dma.done %s185, 4096
        $region40: #{tpu_custom_call.1} parent=35 // pred_fallthru
          _
        %s193 = sand.u32 %s26, 1
        %s194 = scalar_lea.sflag [#allocation3], %s193
        %s195 = sand.u32 %s26, 1
        %s196 = smul.addr %s195, 256
        %s197 = scalar_lea.vmem [#allocation2], %s196
        %p198 = pneg %p39
        %p199 = pneg %p36
        %p200 = pneg %p60
        %p201 = pneg %p57
        %p202 = pneg %p81
        %p203 = pneg %p78
        %p204 = pneg %p102
        %p205 = pneg %p99
        %p206 = pneg %p128
        %p207 = pneg %p125
        %p208 = scmp.lt.s32.totalorder %s18, 1
        %s209 = scalar_select %p208, %s18, 1
        %s210 = smul.addr %s209, 32
        %s211 = smul.addr %s210, 8
        %s212 = scalar_lea.vmem %s4, %s211
        %p213 = scmp.lt.s32.totalorder %s18, 1
        %s214 = scalar_select %p213, %s18, 1
        %s215 = smul.addr %s214, 32
        %s216 = smul.addr %s215, 8
        %s217 = scalar_lea.vmem %s4, %s216
        %v219 = vld [vmem:[%s188] sm:$0xff]
        %v220 = vld [vmem:[%s188 + $0x8] sm:$0xff]
        %v221 = vld [vmem:[%s188 + $0x10] sm:$0xff]
        %v222 = vld [vmem:[%s188 + $0x18] sm:$0xff]
        %v223 = vld [vmem:[%s188 + $0x20] sm:$0xff]
        %v224 = vld [vmem:[%s188 + $0x28] sm:$0xff]
        %v225 = vld [vmem:[%s188 + $0x30] sm:$0xff]
        %v226 = vld [vmem:[%s188 + $0x38] sm:$0xff]
        %v227 = vld [vmem:[%s188 + $0x40] sm:$0xff]
        %v228 = vld [vmem:[%s188 + $0x48] sm:$0xff]
        %v229 = vld [vmem:[%s188 + $0x50] sm:$0xff]
        %v230 = vld [vmem:[%s188 + $0x58] sm:$0xff]
        %v231 = vld [vmem:[%s188 + $0x60] sm:$0xff]
        %v232 = vld [vmem:[%s188 + $0x68] sm:$0xff]
        %v233 = vld [vmem:[%s188 + $0x70] sm:$0xff]
        %v234 = vld [vmem:[%s188 + $0x78] sm:$0xff]
        %v235 = vld [vmem:[%s188 + $0x80] sm:$0xff]
        %v236 = vld [vmem:[%s188 + $0x88] sm:$0xff]
        %v237 = vld [vmem:[%s188 + $0x90] sm:$0xff]
        %v238 = vld [vmem:[%s188 + $0x98] sm:$0xff]
        %v239 = vld [vmem:[%s188 + $0xa0] sm:$0xff]
        %v240 = vld [vmem:[%s188 + $0xa8] sm:$0xff]
        %v241 = vld [vmem:[%s188 + $0xb0] sm:$0xff]
        %v242 = vld [vmem:[%s188 + $0xb8] sm:$0xff]
        %v243 = vld [vmem:[%s188 + $0xc0] sm:$0xff]
        %v244 = vld [vmem:[%s188 + $0xc8] sm:$0xff]
        %v245 = vld [vmem:[%s188 + $0xd0] sm:$0xff]
        %v246 = vld [vmem:[%s188 + $0xd8] sm:$0xff]
        %v247 = vld [vmem:[%s188 + $0xe0] sm:$0xff]
        %v248 = vld [vmem:[%s188 + $0xe8] sm:$0xff]
        %v249 = vld [vmem:[%s188 + $0xf0] sm:$0xff]
        %v250 = vld [vmem:[%s188 + $0xf8] sm:$0xff]
        %v251 = vpack.c.bf16 %v220, %v219
        %v252 = vpack.c.bf16 %v222, %v221
        %v253 = vpack.c.bf16 %v224, %v223
        %v254 = vpack.c.bf16 %v226, %v225
        %v255 = vpack.c.bf16 %v228, %v227
        %v256 = vpack.c.bf16 %v230, %v229
        %v257 = vpack.c.bf16 %v232, %v231
        %v258 = vpack.c.bf16 %v234, %v233
        %v259 = vpack.c.bf16 %v236, %v235
        %v260 = vpack.c.bf16 %v238, %v237
        %v261 = vpack.c.bf16 %v240, %v239
        %v262 = vpack.c.bf16 %v242, %v241
        %v263 = vpack.c.bf16 %v244, %v243
        %v264 = vpack.c.bf16 %v246, %v245
        %v265 = vpack.c.bf16 %v248, %v247
        %v266 = vpack.c.bf16 %v250, %v249
        %v267 = vld [vmem:[%s1] sm:$0xf]
        %v268 = vld [vmem:[%s1 + $0x4] sm:$0xf]
        %v269 = vld [vmem:[%s1 + $0x8] sm:$0xf]
        %v270 = vld [vmem:[%s1 + $0xc] sm:$0xf]
        %v271 = vld [vmem:[%s1 + $0x10] sm:$0xf]
        %v272 = vld [vmem:[%s1 + $0x14] sm:$0xf]
        %v273 = vld [vmem:[%s1 + $0x18] sm:$0xf]
        %v274 = vld [vmem:[%s1 + $0x1c] sm:$0xf]
        %v275 = vld [vmem:[%s1 + $0x20] sm:$0xf]
        %v276 = vld [vmem:[%s1 + $0x24] sm:$0xf]
        %v277 = vld [vmem:[%s1 + $0x28] sm:$0xf]
        %v278 = vld [vmem:[%s1 + $0x2c] sm:$0xf]
        %v279 = vld [vmem:[%s1 + $0x30] sm:$0xf]
        %v280 = vld [vmem:[%s1 + $0x34] sm:$0xf]
        %v281 = vld [vmem:[%s1 + $0x38] sm:$0xf]
        %v282 = vld [vmem:[%s1 + $0x3c] sm:$0xf]
        %v299 = vunpack.c.l.b16 %v267
        %v300 = vunpack.c.l.b16 %v268
        %v301 = vunpack.c.l.b16 %v269
        %v302 = vunpack.c.l.b16 %v270
        %v303 = vunpack.c.l.b16 %v271
        %v304 = vunpack.c.l.b16 %v272
        %v305 = vunpack.c.l.b16 %v273
        %v306 = vunpack.c.l.b16 %v274
        %v307 = vunpack.c.l.b16 %v275
        %v308 = vunpack.c.l.b16 %v276
        %v309 = vunpack.c.l.b16 %v277
        %v310 = vunpack.c.l.b16 %v278
        %v311 = vunpack.c.l.b16 %v279
        %v312 = vunpack.c.l.b16 %v280
        %v313 = vunpack.c.l.b16 %v281
        %v314 = vunpack.c.l.b16 %v282
        %v315 = vpack.c.b16 %v300, %v299
        %v316 = vpack.c.b16 %v302, %v301
        %v317 = vpack.c.b16 %v304, %v303
        %v318 = vpack.c.b16 %v306, %v305
        %v319 = vpack.c.b16 %v308, %v307
        %v320 = vpack.c.b16 %v310, %v309
        %v321 = vpack.c.b16 %v312, %v311
        %v322 = vpack.c.b16 %v314, %v313
        %331 = vmatprep.subr.bf16.mxu0 0
        %332 = vmatpush1.bf16.msra.mxu0 %v322
        %333 = vmatprep.subr.bf16.mxu0 0
        %334 = vmatpush1.bf16.msra.mxu0 %v321
        %335 = vmatprep.subr.bf16.mxu0 0
        %336 = vmatpush1.bf16.msra.mxu0 %v320
        %337 = vmatprep.subr.bf16.mxu0 0
        %338 = vmatpush1.bf16.msra.mxu0 %v319
        %339 = vmatprep.subr.bf16.mxu0 0
        %340 = vmatpush1.bf16.msra.mxu0 %v318
        %341 = vmatprep.subr.bf16.mxu0 0
        %342 = vmatpush1.bf16.msra.mxu0 %v317
        %343 = vmatprep.subr.bf16.mxu0 0
        %344 = vmatpush1.bf16.msra.mxu0 %v316
        %345 = vmatprep.subr.bf16.mxu0 0
        %346 = vmatpush1.bf16.msra.mxu0 %v315
        %347 = vmatprep.subr.bf16.mxu0 0
        %348 = vmatpush2.bf16.msra.mxu0 0
        %349 = vmatprep.subr.bf16.mxu0 0
        %350 = vmatpush2.bf16.msra.mxu0 0
        %351 = vmatprep.subr.bf16.mxu0 0
        %352 = vmatpush2.bf16.msra.mxu0 0
        %353 = vmatprep.subr.bf16.mxu0 0
        %354 = vmatpush2.bf16.msra.mxu0 0
        %355 = vmatprep.subr.bf16.mxu0 0
        %356 = vmatpush2.bf16.msra.mxu0 0
        %357 = vmatprep.subr.bf16.mxu0 0
        %358 = vmatpush2.bf16.msra.mxu0 0
        %359 = vmatprep.subr.bf16.mxu0 0
        %360 = vmatpush2.bf16.msra.mxu0 0
        %361 = vmatprep.subr.bf16.mxu0 0
        %362 = vmatpush2.bf16.msra.mxu0 0
        %363 = vmatprep.mubr.bf16.mxu0 0
        %364 = vmatmul.mubr.bf16.gmra.mxu0 %v251
        %v365 = vpop.f32.mrf.mxu0
        %v366 = vadd.f32 0.0, %v365
        %v367 = vpop.f32.mrf.mxu0
        %v368 = vpop.f32.mrf.mxu0
        %v369 = vadd.f32 0.0, %v368
        %v370 = vpop.f32.mrf.mxu0
        %371 = vmatprep.mubr.bf16.mxu0 0
        %372 = vmatmul.mubr.bf16.gmra.mxu0 %v252
        %v373 = vpop.f32.mrf.mxu0
        %v374 = vadd.f32 0.0, %v373
        %v375 = vpop.f32.mrf.mxu0
        %v376 = vpop.f32.mrf.mxu0
        %v377 = vadd.f32 0.0, %v376
        %v378 = vpop.f32.mrf.mxu0
        %379 = vmatprep.mubr.bf16.mxu0 0
        %380 = vmatmul.mubr.bf16.gmra.mxu0 %v253
        %v381 = vpop.f32.mrf.mxu0
        %v382 = vadd.f32 0.0, %v381
        %v383 = vpop.f32.mrf.mxu0
        %v384 = vpop.f32.mrf.mxu0
        %v385 = vadd.f32 0.0, %v384
        %v386 = vpop.f32.mrf.mxu0
        %387 = vmatprep.mubr.bf16.mxu0 0
        %388 = vmatmul.mubr.bf16.gmra.mxu0 %v254
        %v389 = vpop.f32.mrf.mxu0
        %v390 = vadd.f32 0.0, %v389
        %v391 = vpop.f32.mrf.mxu0
        %v392 = vpop.f32.mrf.mxu0
        %v393 = vadd.f32 0.0, %v392
        %v394 = vpop.f32.mrf.mxu0
        %395 = vmatprep.mubr.bf16.mxu0 0
        %396 = vmatmul.mubr.bf16.gmra.mxu0 %v255
        %v397 = vpop.f32.mrf.mxu0
        %v398 = vadd.f32 0.0, %v397
        %v399 = vpop.f32.mrf.mxu0
        %v400 = vpop.f32.mrf.mxu0
        %v401 = vadd.f32 0.0, %v400
        %v402 = vpop.f32.mrf.mxu0
        %403 = vmatprep.mubr.bf16.mxu0 0
        %404 = vmatmul.mubr.bf16.gmra.mxu0 %v256
        %v405 = vpop.f32.mrf.mxu0
        %v406 = vadd.f32 0.0, %v405
        %v407 = vpop.f32.mrf.mxu0
        %v408 = vpop.f32.mrf.mxu0
        %v409 = vadd.f32 0.0, %v408
        %v410 = vpop.f32.mrf.mxu0
        %411 = vmatprep.mubr.bf16.mxu0 0
        %412 = vmatmul.mubr.bf16.gmra.mxu0 %v257
        %v413 = vpop.f32.mrf.mxu0
        %v414 = vadd.f32 0.0, %v413
        %v415 = vpop.f32.mrf.mxu0
        %v416 = vpop.f32.mrf.mxu0
        %v417 = vadd.f32 0.0, %v416
        %v418 = vpop.f32.mrf.mxu0
        %419 = vmatprep.mubr.bf16.mxu0 0
        %420 = vmatmul.mubr.bf16.gmra.mxu0 %v258
        %v421 = vpop.f32.mrf.mxu0
        %v422 = vadd.f32 0.0, %v421
        %v423 = vpop.f32.mrf.mxu0
        %v424 = vpop.f32.mrf.mxu0
        %v425 = vadd.f32 0.0, %v424
        %v426 = vpop.f32.mrf.mxu0
        %427 = vmatprep.mubr.bf16.mxu0 0
        %428 = vmatmul.mubr.bf16.gmra.mxu0 %v259
        %v429 = vpop.f32.mrf.mxu0
        %v430 = vadd.f32 0.0, %v429
        %v431 = vpop.f32.mrf.mxu0
        %v432 = vpop.f32.mrf.mxu0
        %v433 = vadd.f32 0.0, %v432
        %v434 = vpop.f32.mrf.mxu0
        %435 = vmatprep.mubr.bf16.mxu0 0
        %436 = vmatmul.mubr.bf16.gmra.mxu0 %v260
        %v437 = vpop.f32.mrf.mxu0
        %v438 = vadd.f32 0.0, %v437
        %v439 = vpop.f32.mrf.mxu0
        %v440 = vpop.f32.mrf.mxu0
        %v441 = vadd.f32 0.0, %v440
        %v442 = vpop.f32.mrf.mxu0
        %443 = vmatprep.mubr.bf16.mxu0 0
        %444 = vmatmul.mubr.bf16.gmra.mxu0 %v261
        %v445 = vpop.f32.mrf.mxu0
        %v446 = vadd.f32 0.0, %v445
        %v447 = vpop.f32.mrf.mxu0
        %v448 = vpop.f32.mrf.mxu0
        %v449 = vadd.f32 0.0, %v448
        %v450 = vpop.f32.mrf.mxu0
        %451 = vmatprep.mubr.bf16.mxu0 0
        %452 = vmatmul.mubr.bf16.gmra.mxu0 %v262
        %v453 = vpop.f32.mrf.mxu0
        %v454 = vadd.f32 0.0, %v453
        %v455 = vpop.f32.mrf.mxu0
        %v456 = vpop.f32.mrf.mxu0
        %v457 = vadd.f32 0.0, %v456
        %v458 = vpop.f32.mrf.mxu0
        %459 = vmatprep.mubr.bf16.mxu0 0
        %460 = vmatmul.mubr.bf16.gmra.mxu0 %v263
        %v461 = vpop.f32.mrf.mxu0
        %v462 = vadd.f32 0.0, %v461
        %v463 = vpop.f32.mrf.mxu0
        %v464 = vpop.f32.mrf.mxu0
        %v465 = vadd.f32 0.0, %v464
        %v466 = vpop.f32.mrf.mxu0
        %467 = vmatprep.mubr.bf16.mxu0 0
        %468 = vmatmul.mubr.bf16.gmra.mxu0 %v264
        %v469 = vpop.f32.mrf.mxu0
        %v470 = vadd.f32 0.0, %v469
        %v471 = vpop.f32.mrf.mxu0
        %v472 = vpop.f32.mrf.mxu0
        %v473 = vadd.f32 0.0, %v472
        %v474 = vpop.f32.mrf.mxu0
        %475 = vmatprep.mubr.bf16.mxu0 0
        %476 = vmatmul.mubr.bf16.gmra.mxu0 %v265
        %v477 = vpop.f32.mrf.mxu0
        %v478 = vadd.f32 0.0, %v477
        %v479 = vpop.f32.mrf.mxu0
        %v480 = vpop.f32.mrf.mxu0
        %v481 = vadd.f32 0.0, %v480
        %v482 = vpop.f32.mrf.mxu0
        %483 = vmatprep.mubr.bf16.mxu0 0
        %484 = vmatmul.mubr.bf16.gmra.mxu0 %v266
        %v485 = vpop.f32.mrf.mxu0
        %v486 = vadd.f32 0.0, %v485
        %v487 = vpop.f32.mrf.mxu0
        %v488 = vpop.f32.mrf.mxu0
        %v489 = vadd.f32 0.0, %v488
        %v490 = vpop.f32.mrf.mxu0
        %491 = vdwg.mxu0
        %v492 = vld [vmem:[%s2] sm:$0xf]
        %v493 = vld [vmem:[%s2 + $0x4] sm:$0xf]
        %v494 = vld [vmem:[%s2 + $0x8] sm:$0xf]
        %v495 = vld [vmem:[%s2 + $0xc] sm:$0xf]
        %v496 = vld [vmem:[%s2 + $0x10] sm:$0xf]
        %v497 = vld [vmem:[%s2 + $0x14] sm:$0xf]
        %v498 = vld [vmem:[%s2 + $0x18] sm:$0xf]
        %v499 = vld [vmem:[%s2 + $0x1c] sm:$0xf]
        %v500 = vld [vmem:[%s2 + $0x20] sm:$0xf]
        %v501 = vld [vmem:[%s2 + $0x24] sm:$0xf]
        %v502 = vld [vmem:[%s2 + $0x28] sm:$0xf]
        %v503 = vld [vmem:[%s2 + $0x2c] sm:$0xf]
        %v504 = vld [vmem:[%s2 + $0x30] sm:$0xf]
        %v505 = vld [vmem:[%s2 + $0x34] sm:$0xf]
        %v506 = vld [vmem:[%s2 + $0x38] sm:$0xf]
        %v507 = vld [vmem:[%s2 + $0x3c] sm:$0xf]
        %v524 = vunpack.c.l.b16 %v492
        %v525 = vunpack.c.l.b16 %v493
        %v526 = vunpack.c.l.b16 %v494
        %v527 = vunpack.c.l.b16 %v495
        %v528 = vunpack.c.l.b16 %v496
        %v529 = vunpack.c.l.b16 %v497
        %v530 = vunpack.c.l.b16 %v498
        %v531 = vunpack.c.l.b16 %v499
        %v532 = vunpack.c.l.b16 %v500
        %v533 = vunpack.c.l.b16 %v501
        %v534 = vunpack.c.l.b16 %v502
        %v535 = vunpack.c.l.b16 %v503
        %v536 = vunpack.c.l.b16 %v504
        %v537 = vunpack.c.l.b16 %v505
        %v538 = vunpack.c.l.b16 %v506
        %v539 = vunpack.c.l.b16 %v507
        %v540 = vpack.c.b16 %v525, %v524
        %v541 = vpack.c.b16 %v527, %v526
        %v542 = vpack.c.b16 %v529, %v528
        %v543 = vpack.c.b16 %v531, %v530
        %v544 = vpack.c.b16 %v533, %v532
        %v545 = vpack.c.b16 %v535, %v534
        %v546 = vpack.c.b16 %v537, %v536
        %v547 = vpack.c.b16 %v539, %v538
        %556 = vmatprep.subr.bf16.mxu0 0
        %557 = vmatpush1.bf16.msra.mxu0 %v547
        %558 = vmatprep.subr.bf16.mxu0 0
        %559 = vmatpush1.bf16.msra.mxu0 %v546
        %560 = vmatprep.subr.bf16.mxu0 0
        %561 = vmatpush1.bf16.msra.mxu0 %v545
        %562 = vmatprep.subr.bf16.mxu0 0
        %563 = vmatpush1.bf16.msra.mxu0 %v544
        %564 = vmatprep.subr.bf16.mxu0 0
        %565 = vmatpush1.bf16.msra.mxu0 %v543
        %566 = vmatprep.subr.bf16.mxu0 0
        %567 = vmatpush1.bf16.msra.mxu0 %v542
        %568 = vmatprep.subr.bf16.mxu0 0
        %569 = vmatpush1.bf16.msra.mxu0 %v541
        %570 = vmatprep.subr.bf16.mxu0 0
        %571 = vmatpush1.bf16.msra.mxu0 %v540
        %572 = vmatprep.subr.bf16.mxu0 0
        %573 = vmatpush2.bf16.msra.mxu0 0
        %574 = vmatprep.subr.bf16.mxu0 0
        %575 = vmatpush2.bf16.msra.mxu0 0
        %576 = vmatprep.subr.bf16.mxu0 0
        %577 = vmatpush2.bf16.msra.mxu0 0
        %578 = vmatprep.subr.bf16.mxu0 0
        %579 = vmatpush2.bf16.msra.mxu0 0
        %580 = vmatprep.subr.bf16.mxu0 0
        %581 = vmatpush2.bf16.msra.mxu0 0
        %582 = vmatprep.subr.bf16.mxu0 0
        %583 = vmatpush2.bf16.msra.mxu0 0
        %584 = vmatprep.subr.bf16.mxu0 0
        %585 = vmatpush2.bf16.msra.mxu0 0
        %586 = vmatprep.subr.bf16.mxu0 0
        %587 = vmatpush2.bf16.msra.mxu0 0
        %588 = vmatprep.mubr.bf16.mxu0 0
        %589 = vmatmul.mubr.bf16.gmra.mxu0 %v251
        %v590 = vpop.f32.mrf.mxu0
        %v591 = vadd.f32 0.0, %v590
        %v592 = vpop.f32.mrf.mxu0
        %v593 = vpop.f32.mrf.mxu0
        %v594 = vadd.f32 0.0, %v593
        %v595 = vpop.f32.mrf.mxu0
        %596 = vmatprep.mubr.bf16.mxu0 0
        %597 = vmatmul.mubr.bf16.gmra.mxu0 %v252
        %v598 = vpop.f32.mrf.mxu0
        %v599 = vadd.f32 0.0, %v598
        %v600 = vpop.f32.mrf.mxu0
        %v601 = vpop.f32.mrf.mxu0
        %v602 = vadd.f32 0.0, %v601
        %v603 = vpop.f32.mrf.mxu0
        %604 = vmatprep.mubr.bf16.mxu0 0
        %605 = vmatmul.mubr.bf16.gmra.mxu0 %v253
        %v606 = vpop.f32.mrf.mxu0
        %v607 = vadd.f32 0.0, %v606
        %v608 = vpop.f32.mrf.mxu0
        %v609 = vpop.f32.mrf.mxu0
        %v610 = vadd.f32 0.0, %v609
        %v611 = vpop.f32.mrf.mxu0
        %612 = vmatprep.mubr.bf16.mxu0 0
        %613 = vmatmul.mubr.bf16.gmra.mxu0 %v254
        %v614 = vpop.f32.mrf.mxu0
        %v615 = vadd.f32 0.0, %v614
        %v616 = vpop.f32.mrf.mxu0
        %v617 = vpop.f32.mrf.mxu0
        %v618 = vadd.f32 0.0, %v617
        %v619 = vpop.f32.mrf.mxu0
        %620 = vmatprep.mubr.bf16.mxu0 0
        %621 = vmatmul.mubr.bf16.gmra.mxu0 %v255
        %v622 = vpop.f32.mrf.mxu0
        %v623 = vadd.f32 0.0, %v622
        %v624 = vpop.f32.mrf.mxu0
        %v625 = vpop.f32.mrf.mxu0
        %v626 = vadd.f32 0.0, %v625
        %v627 = vpop.f32.mrf.mxu0
        %628 = vmatprep.mubr.bf16.mxu0 0
        %629 = vmatmul.mubr.bf16.gmra.mxu0 %v256
        %v630 = vpop.f32.mrf.mxu0
        %v631 = vadd.f32 0.0, %v630
        %v632 = vpop.f32.mrf.mxu0
        %v633 = vpop.f32.mrf.mxu0
        %v634 = vadd.f32 0.0, %v633
        %v635 = vpop.f32.mrf.mxu0
        %636 = vmatprep.mubr.bf16.mxu0 0
        %637 = vmatmul.mubr.bf16.gmra.mxu0 %v257
        %v638 = vpop.f32.mrf.mxu0
        %v639 = vadd.f32 0.0, %v638
        %v640 = vpop.f32.mrf.mxu0
        %v641 = vpop.f32.mrf.mxu0
        %v642 = vadd.f32 0.0, %v641
        %v643 = vpop.f32.mrf.mxu0
        %644 = vmatprep.mubr.bf16.mxu0 0
        %645 = vmatmul.mubr.bf16.gmra.mxu0 %v258
        %v646 = vpop.f32.mrf.mxu0
        %v647 = vadd.f32 0.0, %v646
        %v648 = vpop.f32.mrf.mxu0
        %v649 = vpop.f32.mrf.mxu0
        %v650 = vadd.f32 0.0, %v649
        %v651 = vpop.f32.mrf.mxu0
        %652 = vmatprep.mubr.bf16.mxu0 0
        %653 = vmatmul.mubr.bf16.gmra.mxu0 %v259
        %v654 = vpop.f32.mrf.mxu0
        %v655 = vadd.f32 0.0, %v654
        %v656 = vpop.f32.mrf.mxu0
        %v657 = vpop.f32.mrf.mxu0
        %v658 = vadd.f32 0.0, %v657
        %v659 = vpop.f32.mrf.mxu0
        %660 = vmatprep.mubr.bf16.mxu0 0
        %661 = vmatmul.mubr.bf16.gmra.mxu0 %v260
        %v662 = vpop.f32.mrf.mxu0
        %v663 = vadd.f32 0.0, %v662
        %v664 = vpop.f32.mrf.mxu0
        %v665 = vpop.f32.mrf.mxu0
        %v666 = vadd.f32 0.0, %v665
        %v667 = vpop.f32.mrf.mxu0
        %668 = vmatprep.mubr.bf16.mxu0 0
        %669 = vmatmul.mubr.bf16.gmra.mxu0 %v261
        %v670 = vpop.f32.mrf.mxu0
        %v671 = vadd.f32 0.0, %v670
        %v672 = vpop.f32.mrf.mxu0
        %v673 = vpop.f32.mrf.mxu0
        %v674 = vadd.f32 0.0, %v673
        %v675 = vpop.f32.mrf.mxu0
        %676 = vmatprep.mubr.bf16.mxu0 0
        %677 = vmatmul.mubr.bf16.gmra.mxu0 %v262
        %v678 = vpop.f32.mrf.mxu0
        %v679 = vadd.f32 0.0, %v678
        %v680 = vpop.f32.mrf.mxu0
        %v681 = vpop.f32.mrf.mxu0
        %v682 = vadd.f32 0.0, %v681
        %v683 = vpop.f32.mrf.mxu0
        %684 = vmatprep.mubr.bf16.mxu0 0
        %685 = vmatmul.mubr.bf16.gmra.mxu0 %v263
        %v686 = vpop.f32.mrf.mxu0
        %v687 = vadd.f32 0.0, %v686
        %v688 = vpop.f32.mrf.mxu0
        %v689 = vpop.f32.mrf.mxu0
        %v690 = vadd.f32 0.0, %v689
        %v691 = vpop.f32.mrf.mxu0
        %692 = vmatprep.mubr.bf16.mxu0 0
        %693 = vmatmul.mubr.bf16.gmra.mxu0 %v264
        %v694 = vpop.f32.mrf.mxu0
        %v695 = vadd.f32 0.0, %v694
        %v696 = vpop.f32.mrf.mxu0
        %v697 = vpop.f32.mrf.mxu0
        %v698 = vadd.f32 0.0, %v697
        %v699 = vpop.f32.mrf.mxu0
        %700 = vmatprep.mubr.bf16.mxu0 0
        %701 = vmatmul.mubr.bf16.gmra.mxu0 %v265
        %v702 = vpop.f32.mrf.mxu0
        %v703 = vadd.f32 0.0, %v702
        %v704 = vpop.f32.mrf.mxu0
        %v705 = vpop.f32.mrf.mxu0
        %v706 = vadd.f32 0.0, %v705
        %v707 = vpop.f32.mrf.mxu0
        %708 = vmatprep.mubr.bf16.mxu0 0
        %709 = vmatmul.mubr.bf16.gmra.mxu0 %v266
        %v710 = vpop.f32.mrf.mxu0
        %v711 = vadd.f32 0.0, %v710
        %v712 = vpop.f32.mrf.mxu0
        %v713 = vpop.f32.mrf.mxu0
        %v714 = vadd.f32 0.0, %v713
        %v715 = vpop.f32.mrf.mxu0
        %716 = vdwg.mxu0
        %v717 = vld [vmem:[%s3] sm:$0xf]
        %v718 = vld [vmem:[%s3 + $0x4] sm:$0xf]
        %v719 = vld [vmem:[%s3 + $0x8] sm:$0xf]
        %v720 = vld [vmem:[%s3 + $0xc] sm:$0xf]
        %v721 = vld [vmem:[%s3 + $0x10] sm:$0xf]
        %v722 = vld [vmem:[%s3 + $0x14] sm:$0xf]
        %v723 = vld [vmem:[%s3 + $0x18] sm:$0xf]
        %v724 = vld [vmem:[%s3 + $0x1c] sm:$0xf]
        %v725 = vld [vmem:[%s3 + $0x20] sm:$0xf]
        %v726 = vld [vmem:[%s3 + $0x24] sm:$0xf]
        %v727 = vld [vmem:[%s3 + $0x28] sm:$0xf]
        %v728 = vld [vmem:[%s3 + $0x2c] sm:$0xf]
        %v729 = vld [vmem:[%s3 + $0x30] sm:$0xf]
        %v730 = vld [vmem:[%s3 + $0x34] sm:$0xf]
        %v731 = vld [vmem:[%s3 + $0x38] sm:$0xf]
        %v732 = vld [vmem:[%s3 + $0x3c] sm:$0xf]
        %v749 = vunpack.c.l.b16 %v717
        %v750 = vunpack.c.l.b16 %v718
        %v751 = vunpack.c.l.b16 %v719
        %v752 = vunpack.c.l.b16 %v720
        %v753 = vunpack.c.l.b16 %v721
        %v754 = vunpack.c.l.b16 %v722
        %v755 = vunpack.c.l.b16 %v723
        %v756 = vunpack.c.l.b16 %v724
        %v757 = vunpack.c.l.b16 %v725
        %v758 = vunpack.c.l.b16 %v726
        %v759 = vunpack.c.l.b16 %v727
        %v760 = vunpack.c.l.b16 %v728
        %v761 = vunpack.c.l.b16 %v729
        %v762 = vunpack.c.l.b16 %v730
        %v763 = vunpack.c.l.b16 %v731
        %v764 = vunpack.c.l.b16 %v732
        %v765 = vpack.c.b16 %v750, %v749
        %v766 = vpack.c.b16 %v752, %v751
        %v767 = vpack.c.b16 %v754, %v753
        %v768 = vpack.c.b16 %v756, %v755
        %v769 = vpack.c.b16 %v758, %v757
        %v770 = vpack.c.b16 %v760, %v759
        %v771 = vpack.c.b16 %v762, %v761
        %v772 = vpack.c.b16 %v764, %v763
        %781 = vmatprep.subr.bf16.mxu0 0
        %782 = vmatpush1.bf16.msra.mxu0 %v772
        %783 = vmatprep.subr.bf16.mxu0 0
        %784 = vmatpush1.bf16.msra.mxu0 %v771
        %785 = vmatprep.subr.bf16.mxu0 0
        %786 = vmatpush1.bf16.msra.mxu0 %v770
        %787 = vmatprep.subr.bf16.mxu0 0
        %788 = vmatpush1.bf16.msra.mxu0 %v769
        %789 = vmatprep.subr.bf16.mxu0 0
        %790 = vmatpush1.bf16.msra.mxu0 %v768
        %791 = vmatprep.subr.bf16.mxu0 0
        %792 = vmatpush1.bf16.msra.mxu0 %v767
        %793 = vmatprep.subr.bf16.mxu0 0
        %794 = vmatpush1.bf16.msra.mxu0 %v766
        %795 = vmatprep.subr.bf16.mxu0 0
        %796 = vmatpush1.bf16.msra.mxu0 %v765
        %797 = vmatprep.subr.bf16.mxu0 0
        %798 = vmatpush2.bf16.msra.mxu0 0
        %799 = vmatprep.subr.bf16.mxu0 0
        %800 = vmatpush2.bf16.msra.mxu0 0
        %801 = vmatprep.subr.bf16.mxu0 0
        %802 = vmatpush2.bf16.msra.mxu0 0
        %803 = vmatprep.subr.bf16.mxu0 0
        %804 = vmatpush2.bf16.msra.mxu0 0
        %805 = vmatprep.subr.bf16.mxu0 0
        %806 = vmatpush2.bf16.msra.mxu0 0
        %807 = vmatprep.subr.bf16.mxu0 0
        %808 = vmatpush2.bf16.msra.mxu0 0
        %809 = vmatprep.subr.bf16.mxu0 0
        %810 = vmatpush2.bf16.msra.mxu0 0
        %811 = vmatprep.subr.bf16.mxu0 0
        %812 = vmatpush2.bf16.msra.mxu0 0
        %813 = vmatprep.mubr.bf16.mxu0 0
        %814 = vmatmul.mubr.bf16.gmra.mxu0 %v251
        %v815 = vpop.f32.mrf.mxu0
        %v816 = vadd.f32 0.0, %v815
        %v817 = vpop.f32.mrf.mxu0
        %v818 = vpop.f32.mrf.mxu0
        %v819 = vadd.f32 0.0, %v818
        %v820 = vpop.f32.mrf.mxu0
        %821 = vmatprep.mubr.bf16.mxu0 0
        %822 = vmatmul.mubr.bf16.gmra.mxu0 %v252
        %v823 = vpop.f32.mrf.mxu0
        %v824 = vadd.f32 0.0, %v823
        %v825 = vpop.f32.mrf.mxu0
        %v826 = vpop.f32.mrf.mxu0
        %v827 = vadd.f32 0.0, %v826
        %v828 = vpop.f32.mrf.mxu0
        %829 = vmatprep.mubr.bf16.mxu0 0
        %830 = vmatmul.mubr.bf16.gmra.mxu0 %v253
        %v831 = vpop.f32.mrf.mxu0
        %v832 = vadd.f32 0.0, %v831
        %v833 = vpop.f32.mrf.mxu0
        %v834 = vpop.f32.mrf.mxu0
        %v835 = vadd.f32 0.0, %v834
        %v836 = vpop.f32.mrf.mxu0
        %837 = vmatprep.mubr.bf16.mxu0 0
        %838 = vmatmul.mubr.bf16.gmra.mxu0 %v254
        %v839 = vpop.f32.mrf.mxu0
        %v840 = vadd.f32 0.0, %v839
        %v841 = vpop.f32.mrf.mxu0
        %v842 = vpop.f32.mrf.mxu0
        %v843 = vadd.f32 0.0, %v842
        %v844 = vpop.f32.mrf.mxu0
        %845 = vmatprep.mubr.bf16.mxu0 0
        %846 = vmatmul.mubr.bf16.gmra.mxu0 %v255
        %v847 = vpop.f32.mrf.mxu0
        %v848 = vadd.f32 0.0, %v847
        %v849 = vpop.f32.mrf.mxu0
        %v850 = vpop.f32.mrf.mxu0
        %v851 = vadd.f32 0.0, %v850
        %v852 = vpop.f32.mrf.mxu0
        %853 = vmatprep.mubr.bf16.mxu0 0
        %854 = vmatmul.mubr.bf16.gmra.mxu0 %v256
        %v855 = vpop.f32.mrf.mxu0
        %v856 = vadd.f32 0.0, %v855
        %v857 = vpop.f32.mrf.mxu0
        %v858 = vpop.f32.mrf.mxu0
        %v859 = vadd.f32 0.0, %v858
        %v860 = vpop.f32.mrf.mxu0
        %861 = vmatprep.mubr.bf16.mxu0 0
        %862 = vmatmul.mubr.bf16.gmra.mxu0 %v257
        %v863 = vpop.f32.mrf.mxu0
        %v864 = vadd.f32 0.0, %v863
        %v865 = vpop.f32.mrf.mxu0
        %v866 = vpop.f32.mrf.mxu0
        %v867 = vadd.f32 0.0, %v866
        %v868 = vpop.f32.mrf.mxu0
        %869 = vmatprep.mubr.bf16.mxu0 0
        %870 = vmatmul.mubr.bf16.gmra.mxu0 %v258
        %v871 = vpop.f32.mrf.mxu0
        %v872 = vadd.f32 0.0, %v871
        %v873 = vpop.f32.mrf.mxu0
        %v874 = vpop.f32.mrf.mxu0
        %v875 = vadd.f32 0.0, %v874
        %v876 = vpop.f32.mrf.mxu0
        %877 = vmatprep.mubr.bf16.mxu0 0
        %878 = vmatmul.mubr.bf16.gmra.mxu0 %v259
        %v879 = vpop.f32.mrf.mxu0
        %v880 = vadd.f32 0.0, %v879
        %v881 = vpop.f32.mrf.mxu0
        %v882 = vpop.f32.mrf.mxu0
        %v883 = vadd.f32 0.0, %v882
        %v884 = vpop.f32.mrf.mxu0
        %885 = vmatprep.mubr.bf16.mxu0 0
        %886 = vmatmul.mubr.bf16.gmra.mxu0 %v260
        %v887 = vpop.f32.mrf.mxu0
        %v888 = vadd.f32 0.0, %v887
        %v889 = vpop.f32.mrf.mxu0
        %v890 = vpop.f32.mrf.mxu0
        %v891 = vadd.f32 0.0, %v890
        %v892 = vpop.f32.mrf.mxu0
        %893 = vmatprep.mubr.bf16.mxu0 0
        %894 = vmatmul.mubr.bf16.gmra.mxu0 %v261
        %v895 = vpop.f32.mrf.mxu0
        %v896 = vadd.f32 0.0, %v895
        %v897 = vpop.f32.mrf.mxu0
        %v898 = vpop.f32.mrf.mxu0
        %v899 = vadd.f32 0.0, %v898
        %v900 = vpop.f32.mrf.mxu0
        %901 = vmatprep.mubr.bf16.mxu0 0
        %902 = vmatmul.mubr.bf16.gmra.mxu0 %v262
        %v903 = vpop.f32.mrf.mxu0
        %v904 = vadd.f32 0.0, %v903
        %v905 = vpop.f32.mrf.mxu0
        %v906 = vpop.f32.mrf.mxu0
        %v907 = vadd.f32 0.0, %v906
        %v908 = vpop.f32.mrf.mxu0
        %909 = vmatprep.mubr.bf16.mxu0 0
        %910 = vmatmul.mubr.bf16.gmra.mxu0 %v263
        %v911 = vpop.f32.mrf.mxu0
        %v912 = vadd.f32 0.0, %v911
        %v913 = vpop.f32.mrf.mxu0
        %v914 = vpop.f32.mrf.mxu0
        %v915 = vadd.f32 0.0, %v914
        %v916 = vpop.f32.mrf.mxu0
        %917 = vmatprep.mubr.bf16.mxu0 0
        %918 = vmatmul.mubr.bf16.gmra.mxu0 %v264
        %v919 = vpop.f32.mrf.mxu0
        %v920 = vadd.f32 0.0, %v919
        %v921 = vpop.f32.mrf.mxu0
        %v922 = vpop.f32.mrf.mxu0
        %v923 = vadd.f32 0.0, %v922
        %v924 = vpop.f32.mrf.mxu0
        %925 = vmatprep.mubr.bf16.mxu0 0
        %926 = vmatmul.mubr.bf16.gmra.mxu0 %v265
        %v927 = vpop.f32.mrf.mxu0
        %v928 = vadd.f32 0.0, %v927
        %v929 = vpop.f32.mrf.mxu0
        %v930 = vpop.f32.mrf.mxu0
        %v931 = vadd.f32 0.0, %v930
        %v932 = vpop.f32.mrf.mxu0
        %933 = vmatprep.mubr.bf16.mxu0 0
        %934 = vmatmul.mubr.bf16.gmra.mxu0 %v266
        %v935 = vpop.f32.mrf.mxu0
        %v936 = vadd.f32 0.0, %v935
        %v937 = vpop.f32.mrf.mxu0
        %v938 = vpop.f32.mrf.mxu0
        %v939 = vadd.f32 0.0, %v938
        %v940 = vpop.f32.mrf.mxu0
        %941 = vdwg.mxu0
        %v942 = vpack.c.bf16 %v369, %v366
        %v943 = vpack.c.bf16 %v377, %v374
        %v944 = vpack.c.bf16 %v385, %v382
        %v945 = vpack.c.bf16 %v393, %v390
        %v946 = vpack.c.bf16 %v401, %v398
        %v947 = vpack.c.bf16 %v409, %v406
        %v948 = vpack.c.bf16 %v417, %v414
        %v949 = vpack.c.bf16 %v425, %v422
        %v950 = vpack.c.bf16 %v433, %v430
        %v951 = vpack.c.bf16 %v441, %v438
        %v952 = vpack.c.bf16 %v449, %v446
        %v953 = vpack.c.bf16 %v457, %v454
        %v954 = vpack.c.bf16 %v465, %v462
        %v955 = vpack.c.bf16 %v473, %v470
        %v956 = vpack.c.bf16 %v481, %v478
        %v957 = vpack.c.bf16 %v489, %v486
        %v958 = vpack.c.bf16 %v594, %v591
        %v959 = vpack.c.bf16 %v602, %v599
        %v960 = vpack.c.bf16 %v610, %v607
        %v961 = vpack.c.bf16 %v618, %v615
        %v962 = vpack.c.bf16 %v626, %v623
        %v963 = vpack.c.bf16 %v634, %v631
        %v964 = vpack.c.bf16 %v642, %v639
        %v965 = vpack.c.bf16 %v650, %v647
        %v966 = vpack.c.bf16 %v658, %v655
        %v967 = vpack.c.bf16 %v666, %v663
        %v968 = vpack.c.bf16 %v674, %v671
        %v969 = vpack.c.bf16 %v682, %v679
        %v970 = vpack.c.bf16 %v690, %v687
        %v971 = vpack.c.bf16 %v698, %v695
        %v972 = vpack.c.bf16 %v706, %v703
        %v973 = vpack.c.bf16 %v714, %v711
        %vm974 = vcmask 261120
        %v976 = vsel %vm974, %v942, 0
        %v979 = vsel %vm974, %v943, 0
        %v982 = vsel %vm974, %v944, 0
        %v985 = vsel %vm974, %v945, 0
        %v988 = vsel %vm974, %v946, 0
        %v991 = vsel %vm974, %v947, 0
        %v994 = vsel %vm974, %v948, 0
        %v997 = vsel %vm974, %v949, 0
        %v1000 = vsel %vm974, %v950, 0
        %v1003 = vsel %vm974, %v951, 0
        %v1006 = vsel %vm974, %v952, 0
        %v1009 = vsel %vm974, %v953, 0
        %v1012 = vsel %vm974, %v954, 0
        %v1015 = vsel %vm974, %v955, 0
        %v1018 = vsel %vm974, %v956, 0
        %v1021 = vsel %vm974, %v957, 0
        %v1024 = vsel %vm974, %v958, 0
        %v1027 = vsel %vm974, %v959, 0
        %v1030 = vsel %vm974, %v960, 0
        %v1033 = vsel %vm974, %v961, 0
        %v1036 = vsel %vm974, %v962, 0
        %v1039 = vsel %vm974, %v963, 0
        %v1042 = vsel %vm974, %v964, 0
        %v1045 = vsel %vm974, %v965, 0
        %v1048 = vsel %vm974, %v966, 0
        %v1051 = vsel %vm974, %v967, 0
        %v1054 = vsel %vm974, %v968, 0
        %v1057 = vsel %vm974, %v969, 0
        %v1060 = vsel %vm974, %v970, 0
        %v1063 = vsel %vm974, %v971, 0
        %v1066 = vsel %vm974, %v972, 0
        %v1069 = vsel %vm974, %v973, 0
        %1071 = vmatprep.subr.bf16.mxu0 0
        %1072 = vmatpush1.bf16.xpose.msra.mxu0 %v1045
        %1073 = vmatprep.subr.bf16.mxu0 0
        %1074 = vmatpush1.bf16.xpose.msra.mxu0 %v1042
        %1075 = vmatprep.subr.bf16.mxu0 0
        %1076 = vmatpush1.bf16.xpose.msra.mxu0 %v1039
        %1077 = vmatprep.subr.bf16.mxu0 0
        %1078 = vmatpush1.bf16.xpose.msra.mxu0 %v1036
        %1079 = vmatprep.subr.bf16.mxu0 0
        %1080 = vmatpush1.bf16.xpose.msra.mxu0 %v1033
        %1081 = vmatprep.subr.bf16.mxu0 0
        %1082 = vmatpush1.bf16.xpose.msra.mxu0 %v1030
        %1083 = vmatprep.subr.bf16.mxu0 0
        %1084 = vmatpush1.bf16.xpose.msra.mxu0 %v1027
        %1085 = vmatprep.subr.bf16.mxu0 0
        %1086 = vmatpush1.bf16.xpose.msra.mxu0 %v1024
        %1087 = vmatprep.subr.bf16.mxu0 0
        %1088 = vmatpush2.bf16.xpose.msra.mxu0 %v1069
        %1089 = vmatprep.subr.bf16.mxu0 0
        %1090 = vmatpush2.bf16.xpose.msra.mxu0 %v1066
        %1091 = vmatprep.subr.bf16.mxu0 0
        %1092 = vmatpush2.bf16.xpose.msra.mxu0 %v1063
        %1093 = vmatprep.subr.bf16.mxu0 0
        %1094 = vmatpush2.bf16.xpose.msra.mxu0 %v1060
        %1095 = vmatprep.subr.bf16.mxu0 0
        %1096 = vmatpush2.bf16.xpose.msra.mxu0 %v1057
        %1097 = vmatprep.subr.bf16.mxu0 0
        %1098 = vmatpush2.bf16.xpose.msra.mxu0 %v1054
        %1099 = vmatprep.subr.bf16.mxu0 0
        %1100 = vmatpush2.bf16.xpose.msra.mxu0 %v1051
        %1101 = vmatprep.subr.bf16.mxu0 0
        %1102 = vmatpush2.bf16.xpose.msra.mxu0 %v1048
        %1103 = vmatprep.mubr.bf16.mxu0 0
        %1104 = vmatmul.mubr.bf16.gmra.mxu0 %v976
        %v1105 = vpop.f32.mrf.mxu0
        %v1106 = vadd.f32 0.0, %v1105
        %v1107 = vpop.f32.mrf.mxu0
        %v1108 = vadd.f32 0.0, %v1107
        %v1109 = vpop.f32.mrf.mxu0
        %v1110 = vadd.f32 0.0, %v1109
        %v1111 = vpop.f32.mrf.mxu0
        %v1112 = vadd.f32 0.0, %v1111
        %1113 = vmatprep.mubr.bf16.mxu0 0
        %1114 = vmatmul.mubr.bf16.gmra.mxu0 %v979
        %v1115 = vpop.f32.mrf.mxu0
        %v1116 = vadd.f32 0.0, %v1115
        %v1117 = vpop.f32.mrf.mxu0
        %v1118 = vadd.f32 0.0, %v1117
        %v1119 = vpop.f32.mrf.mxu0
        %v1120 = vadd.f32 0.0, %v1119
        %v1121 = vpop.f32.mrf.mxu0
        %v1122 = vadd.f32 0.0, %v1121
        %1123 = vmatprep.mubr.bf16.mxu0 0
        %1124 = vmatmul.mubr.bf16.gmra.mxu0 %v982
        %v1125 = vpop.f32.mrf.mxu0
        %v1126 = vadd.f32 0.0, %v1125
        %v1127 = vpop.f32.mrf.mxu0
        %v1128 = vadd.f32 0.0, %v1127
        %v1129 = vpop.f32.mrf.mxu0
        %v1130 = vadd.f32 0.0, %v1129
        %v1131 = vpop.f32.mrf.mxu0
        %v1132 = vadd.f32 0.0, %v1131
        %1133 = vmatprep.mubr.bf16.mxu0 0
        %1134 = vmatmul.mubr.bf16.gmra.mxu0 %v985
        %v1135 = vpop.f32.mrf.mxu0
        %v1136 = vadd.f32 0.0, %v1135
        %v1137 = vpop.f32.mrf.mxu0
        %v1138 = vadd.f32 0.0, %v1137
        %v1139 = vpop.f32.mrf.mxu0
        %v1140 = vadd.f32 0.0, %v1139
        %v1141 = vpop.f32.mrf.mxu0
        %v1142 = vadd.f32 0.0, %v1141
        %1143 = vmatprep.mubr.bf16.mxu0 0
        %1144 = vmatmul.mubr.bf16.gmra.mxu0 %v988
        %v1145 = vpop.f32.mrf.mxu0
        %v1146 = vadd.f32 0.0, %v1145
        %v1147 = vpop.f32.mrf.mxu0
        %v1148 = vadd.f32 0.0, %v1147
        %v1149 = vpop.f32.mrf.mxu0
        %v1150 = vadd.f32 0.0, %v1149
        %v1151 = vpop.f32.mrf.mxu0
        %v1152 = vadd.f32 0.0, %v1151
        %1153 = vmatprep.mubr.bf16.mxu0 0
        %1154 = vmatmul.mubr.bf16.gmra.mxu0 %v991
        %v1155 = vpop.f32.mrf.mxu0
        %v1156 = vadd.f32 0.0, %v1155
        %v1157 = vpop.f32.mrf.mxu0
        %v1158 = vadd.f32 0.0, %v1157
        %v1159 = vpop.f32.mrf.mxu0
        %v1160 = vadd.f32 0.0, %v1159
        %v1161 = vpop.f32.mrf.mxu0
        %v1162 = vadd.f32 0.0, %v1161
        %1163 = vmatprep.mubr.bf16.mxu0 0
        %1164 = vmatmul.mubr.bf16.gmra.mxu0 %v994
        %v1165 = vpop.f32.mrf.mxu0
        %v1166 = vadd.f32 0.0, %v1165
        %v1167 = vpop.f32.mrf.mxu0
        %v1168 = vadd.f32 0.0, %v1167
        %v1169 = vpop.f32.mrf.mxu0
        %v1170 = vadd.f32 0.0, %v1169
        %v1171 = vpop.f32.mrf.mxu0
        %v1172 = vadd.f32 0.0, %v1171
        %1173 = vmatprep.mubr.bf16.mxu0 0
        %1174 = vmatmul.mubr.bf16.gmra.mxu0 %v997
        %v1175 = vpop.f32.mrf.mxu0
        %v1176 = vadd.f32 0.0, %v1175
        %v1177 = vpop.f32.mrf.mxu0
        %v1178 = vadd.f32 0.0, %v1177
        %v1179 = vpop.f32.mrf.mxu0
        %v1180 = vadd.f32 0.0, %v1179
        %v1181 = vpop.f32.mrf.mxu0
        %v1182 = vadd.f32 0.0, %v1181
        %1183 = vmatprep.mubr.bf16.mxu0 0
        %1184 = vmatmul.mubr.bf16.gmra.mxu0 %v1000
        %v1185 = vpop.f32.mrf.mxu0
        %v1186 = vadd.f32 0.0, %v1185
        %v1187 = vpop.f32.mrf.mxu0
        %v1188 = vadd.f32 0.0, %v1187
        %v1189 = vpop.f32.mrf.mxu0
        %v1190 = vadd.f32 0.0, %v1189
        %v1191 = vpop.f32.mrf.mxu0
        %v1192 = vadd.f32 0.0, %v1191
        %1193 = vmatprep.mubr.bf16.mxu0 0
        %1194 = vmatmul.mubr.bf16.gmra.mxu0 %v1003
        %v1195 = vpop.f32.mrf.mxu0
        %v1196 = vadd.f32 0.0, %v1195
        %v1197 = vpop.f32.mrf.mxu0
        %v1198 = vadd.f32 0.0, %v1197
        %v1199 = vpop.f32.mrf.mxu0
        %v1200 = vadd.f32 0.0, %v1199
        %v1201 = vpop.f32.mrf.mxu0
        %v1202 = vadd.f32 0.0, %v1201
        %1203 = vmatprep.mubr.bf16.mxu0 0
        %1204 = vmatmul.mubr.bf16.gmra.mxu0 %v1006
        %v1205 = vpop.f32.mrf.mxu0
        %v1206 = vadd.f32 0.0, %v1205
        %v1207 = vpop.f32.mrf.mxu0
        %v1208 = vadd.f32 0.0, %v1207
        %v1209 = vpop.f32.mrf.mxu0
        %v1210 = vadd.f32 0.0, %v1209
        %v1211 = vpop.f32.mrf.mxu0
        %v1212 = vadd.f32 0.0, %v1211
        %1213 = vmatprep.mubr.bf16.mxu0 0
        %1214 = vmatmul.mubr.bf16.gmra.mxu0 %v1009
        %v1215 = vpop.f32.mrf.mxu0
        %v1216 = vadd.f32 0.0, %v1215
        %v1217 = vpop.f32.mrf.mxu0
        %v1218 = vadd.f32 0.0, %v1217
        %v1219 = vpop.f32.mrf.mxu0
        %v1220 = vadd.f32 0.0, %v1219
        %v1221 = vpop.f32.mrf.mxu0
        %v1222 = vadd.f32 0.0, %v1221
        %1223 = vmatprep.mubr.bf16.mxu0 0
        %1224 = vmatmul.mubr.bf16.gmra.mxu0 %v1012
        %v1225 = vpop.f32.mrf.mxu0
        %v1226 = vadd.f32 0.0, %v1225
        %v1227 = vpop.f32.mrf.mxu0
        %v1228 = vadd.f32 0.0, %v1227
        %v1229 = vpop.f32.mrf.mxu0
        %v1230 = vadd.f32 0.0, %v1229
        %v1231 = vpop.f32.mrf.mxu0
        %v1232 = vadd.f32 0.0, %v1231
        %1233 = vmatprep.mubr.bf16.mxu0 0
        %1234 = vmatmul.mubr.bf16.gmra.mxu0 %v1015
        %v1235 = vpop.f32.mrf.mxu0
        %v1236 = vadd.f32 0.0, %v1235
        %v1237 = vpop.f32.mrf.mxu0
        %v1238 = vadd.f32 0.0, %v1237
        %v1239 = vpop.f32.mrf.mxu0
        %v1240 = vadd.f32 0.0, %v1239
        %v1241 = vpop.f32.mrf.mxu0
        %v1242 = vadd.f32 0.0, %v1241
        %1243 = vmatprep.mubr.bf16.mxu0 0
        %1244 = vmatmul.mubr.bf16.gmra.mxu0 %v1018
        %v1245 = vpop.f32.mrf.mxu0
        %v1246 = vadd.f32 0.0, %v1245
        %v1247 = vpop.f32.mrf.mxu0
        %v1248 = vadd.f32 0.0, %v1247
        %v1249 = vpop.f32.mrf.mxu0
        %v1250 = vadd.f32 0.0, %v1249
        %v1251 = vpop.f32.mrf.mxu0
        %v1252 = vadd.f32 0.0, %v1251
        %1253 = vmatprep.mubr.bf16.mxu0 0
        %1254 = vmatmul.mubr.bf16.gmra.mxu0 %v1021
        %v1255 = vpop.f32.mrf.mxu0
        %v1256 = vadd.f32 0.0, %v1255
        %v1257 = vpop.f32.mrf.mxu0
        %v1258 = vadd.f32 0.0, %v1257
        %v1259 = vpop.f32.mrf.mxu0
        %v1260 = vadd.f32 0.0, %v1259
        %v1261 = vpop.f32.mrf.mxu0
        %v1262 = vadd.f32 0.0, %v1261
        %1263 = vdwg.mxu0
        %v1264 = vlaneseq
        %v1265 = vshrl.u32 %v1264, 7
        %v1266 = vadd.s32 %v1265, 8
        %v1267 = vadd.s32 %v1265, 16
        %v1268 = vadd.s32 %v1265, 24
        %v1269 = vadd.s32 %v1265, 32
        %v1270 = vadd.s32 %v1265, 40
        %v1271 = vadd.s32 %v1265, 48
        %v1272 = vadd.s32 %v1265, 56
        %v1273 = vadd.s32 %v1265, 64
        %v1274 = vadd.s32 %v1265, 72
        %v1275 = vadd.s32 %v1265, 80
        %v1276 = vadd.s32 %v1265, 88
        %v1277 = vadd.s32 %v1265, 96
        %v1278 = vadd.s32 %v1265, 104
        %v1279 = vadd.s32 %v1265, 112
        %v1280 = vadd.s32 %v1265, 120
        %v1281 = vadd.s32 %v1265, 128
        %v1282 = vadd.s32 %v1265, 136
        %v1283 = vadd.s32 %v1265, 144
        %v1284 = vadd.s32 %v1265, 152
        %v1285 = vadd.s32 %v1265, 160
        %v1286 = vadd.s32 %v1265, 168
        %v1287 = vadd.s32 %v1265, 176
        %v1288 = vadd.s32 %v1265, 184
        %v1289 = vadd.s32 %v1265, 192
        %v1290 = vadd.s32 %v1265, 200
        %v1291 = vadd.s32 %v1265, 208
        %v1292 = vadd.s32 %v1265, 216
        %v1293 = vadd.s32 %v1265, 224
        %v1294 = vadd.s32 %v1265, 232
        %v1295 = vadd.s32 %v1265, 240
        %v1296 = vadd.s32 %v1265, 248
        %v1297 = vlaneseq
        %v1298 = vand.u32 %v1297, 127
        %v1299 = vadd.s32 %v1298, 128
        %vm1300 = vcmp.ge.s32.totalorder %v1265, %v1298
        %vm1301 = vcmp.ge.s32.totalorder %v1265, %v1299
        %vm1302 = vcmp.ge.s32.totalorder %v1266, %v1298
        %vm1303 = vcmp.ge.s32.totalorder %v1266, %v1299
        %vm1304 = vcmp.ge.s32.totalorder %v1267, %v1298
        %vm1305 = vcmp.ge.s32.totalorder %v1267, %v1299
        %vm1306 = vcmp.ge.s32.totalorder %v1268, %v1298
        %vm1307 = vcmp.ge.s32.totalorder %v1268, %v1299
        %vm1308 = vcmp.ge.s32.totalorder %v1269, %v1298
        %vm1309 = vcmp.ge.s32.totalorder %v1269, %v1299
        %vm1310 = vcmp.ge.s32.totalorder %v1270, %v1298
        %vm1311 = vcmp.ge.s32.totalorder %v1270, %v1299
        %vm1312 = vcmp.ge.s32.totalorder %v1271, %v1298
        %vm1313 = vcmp.ge.s32.totalorder %v1271, %v1299
        %vm1314 = vcmp.ge.s32.totalorder %v1272, %v1298
        %vm1315 = vcmp.ge.s32.totalorder %v1272, %v1299
        %vm1316 = vcmp.ge.s32.totalorder %v1273, %v1298
        %vm1317 = vcmp.ge.s32.totalorder %v1273, %v1299
        %vm1318 = vcmp.ge.s32.totalorder %v1274, %v1298
        %vm1319 = vcmp.ge.s32.totalorder %v1274, %v1299
        %vm1320 = vcmp.ge.s32.totalorder %v1275, %v1298
        %vm1321 = vcmp.ge.s32.totalorder %v1275, %v1299
        %vm1322 = vcmp.ge.s32.totalorder %v1276, %v1298
        %vm1323 = vcmp.ge.s32.totalorder %v1276, %v1299
        %vm1324 = vcmp.ge.s32.totalorder %v1277, %v1298
        %vm1325 = vcmp.ge.s32.totalorder %v1277, %v1299
        %vm1326 = vcmp.ge.s32.totalorder %v1278, %v1298
        %vm1327 = vcmp.ge.s32.totalorder %v1278, %v1299
        %vm1328 = vcmp.ge.s32.totalorder %v1279, %v1298
        %vm1329 = vcmp.ge.s32.totalorder %v1279, %v1299
        %vm1330 = vcmp.ge.s32.totalorder %v1280, %v1298
        %vm1331 = vcmp.ge.s32.totalorder %v1280, %v1299
        %vm1332 = vcmp.ge.s32.totalorder %v1281, %v1298
        %vm1333 = vcmp.ge.s32.totalorder %v1281, %v1299
        %vm1334 = vcmp.ge.s32.totalorder %v1282, %v1298
        %vm1335 = vcmp.ge.s32.totalorder %v1282, %v1299
        %vm1336 = vcmp.ge.s32.totalorder %v1283, %v1298
        %vm1337 = vcmp.ge.s32.totalorder %v1283, %v1299
        %vm1338 = vcmp.ge.s32.totalorder %v1284, %v1298
        %vm1339 = vcmp.ge.s32.totalorder %v1284, %v1299
        %vm1340 = vcmp.ge.s32.totalorder %v1285, %v1298
        %vm1341 = vcmp.ge.s32.totalorder %v1285, %v1299
        %vm1342 = vcmp.ge.s32.totalorder %v1286, %v1298
        %vm1343 = vcmp.ge.s32.totalorder %v1286, %v1299
        %vm1344 = vcmp.ge.s32.totalorder %v1287, %v1298
        %vm1345 = vcmp.ge.s32.totalorder %v1287, %v1299
        %vm1346 = vcmp.ge.s32.totalorder %v1288, %v1298
        %vm1347 = vcmp.ge.s32.totalorder %v1288, %v1299
        %vm1348 = vcmp.ge.s32.totalorder %v1289, %v1298
        %vm1349 = vcmp.ge.s32.totalorder %v1289, %v1299
        %vm1350 = vcmp.ge.s32.totalorder %v1290, %v1298
        %vm1351 = vcmp.ge.s32.totalorder %v1290, %v1299
        %vm1352 = vcmp.ge.s32.totalorder %v1291, %v1298
        %vm1353 = vcmp.ge.s32.totalorder %v1291, %v1299
        %vm1354 = vcmp.ge.s32.totalorder %v1292, %v1298
        %vm1355 = vcmp.ge.s32.totalorder %v1292, %v1299
        %vm1356 = vcmp.ge.s32.totalorder %v1293, %v1298
        %vm1357 = vcmp.ge.s32.totalorder %v1293, %v1299
        %vm1358 = vcmp.ge.s32.totalorder %v1294, %v1298
        %vm1359 = vcmp.ge.s32.totalorder %v1294, %v1299
        %vm1360 = vcmp.ge.s32.totalorder %v1295, %v1298
        %vm1361 = vcmp.ge.s32.totalorder %v1295, %v1299
        %vm1362 = vcmp.ge.s32.totalorder %v1296, %v1298
        %vm1363 = vcmp.ge.s32.totalorder %v1296, %v1299
        %v1364 = vsel %vm1300, %v1106, -inf
        %v1365 = vsel %vm1301, %v1108, -inf
        %v1366 = vsel %vm1302, %v1110, -inf
        %v1367 = vsel %vm1303, %v1112, -inf
        %v1368 = vsel %vm1304, %v1116, -inf
        %v1369 = vsel %vm1305, %v1118, -inf
        %v1370 = vsel %vm1306, %v1120, -inf
        %v1371 = vsel %vm1307, %v1122, -inf
        %v1372 = vsel %vm1308, %v1126, -inf
        %v1373 = vsel %vm1309, %v1128, -inf
        %v1374 = vsel %vm1310, %v1130, -inf
        %v1375 = vsel %vm1311, %v1132, -inf
        %v1376 = vsel %vm1312, %v1136, -inf
        %v1377 = vsel %vm1313, %v1138, -inf
        %v1378 = vsel %vm1314, %v1140, -inf
        %v1379 = vsel %vm1315, %v1142, -inf
        %v1380 = vsel %vm1316, %v1146, -inf
        %v1381 = vsel %vm1317, %v1148, -inf
        %v1382 = vsel %vm1318, %v1150, -inf
        %v1383 = vsel %vm1319, %v1152, -inf
        %v1384 = vsel %vm1320, %v1156, -inf
        %v1385 = vsel %vm1321, %v1158, -inf
        %v1386 = vsel %vm1322, %v1160, -inf
        %v1387 = vsel %vm1323, %v1162, -inf
        %v1388 = vsel %vm1324, %v1166, -inf
        %v1389 = vsel %vm1325, %v1168, -inf
        %v1390 = vsel %vm1326, %v1170, -inf
        %v1391 = vsel %vm1327, %v1172, -inf
        %v1392 = vsel %vm1328, %v1176, -inf
        %v1393 = vsel %vm1329, %v1178, -inf
        %v1394 = vsel %vm1330, %v1180, -inf
        %v1395 = vsel %vm1331, %v1182, -inf
        %v1396 = vsel %vm1332, %v1186, -inf
        %v1397 = vsel %vm1333, %v1188, -inf
        %v1398 = vsel %vm1334, %v1190, -inf
        %v1399 = vsel %vm1335, %v1192, -inf
        %v1400 = vsel %vm1336, %v1196, -inf
        %v1401 = vsel %vm1337, %v1198, -inf
        %v1402 = vsel %vm1338, %v1200, -inf
        %v1403 = vsel %vm1339, %v1202, -inf
        %v1404 = vsel %vm1340, %v1206, -inf
        %v1405 = vsel %vm1341, %v1208, -inf
        %v1406 = vsel %vm1342, %v1210, -inf
        %v1407 = vsel %vm1343, %v1212, -inf
        %v1408 = vsel %vm1344, %v1216, -inf
        %v1409 = vsel %vm1345, %v1218, -inf
        %v1410 = vsel %vm1346, %v1220, -inf
        %v1411 = vsel %vm1347, %v1222, -inf
        %v1412 = vsel %vm1348, %v1226, -inf
        %v1413 = vsel %vm1349, %v1228, -inf
        %v1414 = vsel %vm1350, %v1230, -inf
        %v1415 = vsel %vm1351, %v1232, -inf
        %v1416 = vsel %vm1352, %v1236, -inf
        %v1417 = vsel %vm1353, %v1238, -inf
        %v1418 = vsel %vm1354, %v1240, -inf
        %v1419 = vsel %vm1355, %v1242, -inf
        %v1420 = vsel %vm1356, %v1246, -inf
        %v1421 = vsel %vm1357, %v1248, -inf
        %v1422 = vsel %vm1358, %v1250, -inf
        %v1423 = vsel %vm1359, %v1252, -inf
        %v1424 = vsel %vm1360, %v1256, -inf
        %v1425 = vsel %vm1361, %v1258, -inf
        %v1426 = vsel %vm1362, %v1260, -inf
        %v1427 = vsel %vm1363, %v1262, -inf
        %v1428 = vmax.f32 %v1364, %v1365
        %1429 = vmax.xlane.f32.xlu0 %v1428
        %v1430 = vpop.xlane.xlu0 %1429
        %v1431 = vmax.f32 %v1366, %v1367
        %1432 = vmax.xlane.f32.xlu0 %v1431
        %v1433 = vpop.xlane.xlu0 %1432
        %v1434 = vmax.f32 %v1368, %v1369
        %1435 = vmax.xlane.f32.xlu0 %v1434
        %v1436 = vpop.xlane.xlu0 %1435
        %v1437 = vmax.f32 %v1370, %v1371
        %1438 = vmax.xlane.f32.xlu0 %v1437
        %v1439 = vpop.xlane.xlu0 %1438
        %v1440 = vmax.f32 %v1372, %v1373
        %1441 = vmax.xlane.f32.xlu0 %v1440
        %v1442 = vpop.xlane.xlu0 %1441
        %v1443 = vmax.f32 %v1374, %v1375
        %1444 = vmax.xlane.f32.xlu0 %v1443
        %v1445 = vpop.xlane.xlu0 %1444
        %v1446 = vmax.f32 %v1376, %v1377
        %1447 = vmax.xlane.f32.xlu0 %v1446
        %v1448 = vpop.xlane.xlu0 %1447
        %v1449 = vmax.f32 %v1378, %v1379
        %1450 = vmax.xlane.f32.xlu0 %v1449
        %v1451 = vpop.xlane.xlu0 %1450
        %v1452 = vmax.f32 %v1380, %v1381
        %1453 = vmax.xlane.f32.xlu0 %v1452
        %v1454 = vpop.xlane.xlu0 %1453
        %v1455 = vmax.f32 %v1382, %v1383
        %1456 = vmax.xlane.f32.xlu0 %v1455
        %v1457 = vpop.xlane.xlu0 %1456
        %v1458 = vmax.f32 %v1384, %v1385
        %1459 = vmax.xlane.f32.xlu0 %v1458
        %v1460 = vpop.xlane.xlu0 %1459
        %v1461 = vmax.f32 %v1386, %v1387
        %1462 = vmax.xlane.f32.xlu0 %v1461
        %v1463 = vpop.xlane.xlu0 %1462
        %v1464 = vmax.f32 %v1388, %v1389
        %1465 = vmax.xlane.f32.xlu0 %v1464
        %v1466 = vpop.xlane.xlu0 %1465
        %v1467 = vmax.f32 %v1390, %v1391
        %1468 = vmax.xlane.f32.xlu0 %v1467
        %v1469 = vpop.xlane.xlu0 %1468
        %v1470 = vmax.f32 %v1392, %v1393
        %1471 = vmax.xlane.f32.xlu0 %v1470
        %v1472 = vpop.xlane.xlu0 %1471
        %v1473 = vmax.f32 %v1394, %v1395
        %1474 = vmax.xlane.f32.xlu0 %v1473
        %v1475 = vpop.xlane.xlu0 %1474
        %v1476 = vmax.f32 %v1396, %v1397
        %1477 = vmax.xlane.f32.xlu0 %v1476
        %v1478 = vpop.xlane.xlu0 %1477
        %v1479 = vmax.f32 %v1398, %v1399
        %1480 = vmax.xlane.f32.xlu0 %v1479
        %v1481 = vpop.xlane.xlu0 %1480
        %v1482 = vmax.f32 %v1400, %v1401
        %1483 = vmax.xlane.f32.xlu0 %v1482
        %v1484 = vpop.xlane.xlu0 %1483
        %v1485 = vmax.f32 %v1402, %v1403
        %1486 = vmax.xlane.f32.xlu0 %v1485
        %v1487 = vpop.xlane.xlu0 %1486
        %v1488 = vmax.f32 %v1404, %v1405
        %1489 = vmax.xlane.f32.xlu0 %v1488
        %v1490 = vpop.xlane.xlu0 %1489
        %v1491 = vmax.f32 %v1406, %v1407
        %1492 = vmax.xlane.f32.xlu0 %v1491
        %v1493 = vpop.xlane.xlu0 %1492
        %v1494 = vmax.f32 %v1408, %v1409
        %1495 = vmax.xlane.f32.xlu0 %v1494
        %v1496 = vpop.xlane.xlu0 %1495
        %v1497 = vmax.f32 %v1410, %v1411
        %1498 = vmax.xlane.f32.xlu0 %v1497
        %v1499 = vpop.xlane.xlu0 %1498
        %v1500 = vmax.f32 %v1412, %v1413
        %1501 = vmax.xlane.f32.xlu0 %v1500
        %v1502 = vpop.xlane.xlu0 %1501
        %v1503 = vmax.f32 %v1414, %v1415
        %1504 = vmax.xlane.f32.xlu0 %v1503
        %v1505 = vpop.xlane.xlu0 %1504
        %v1506 = vmax.f32 %v1416, %v1417
        %1507 = vmax.xlane.f32.xlu0 %v1506
        %v1508 = vpop.xlane.xlu0 %1507
        %v1509 = vmax.f32 %v1418, %v1419
        %1510 = vmax.xlane.f32.xlu0 %v1509
        %v1511 = vpop.xlane.xlu0 %1510
        %v1512 = vmax.f32 %v1420, %v1421
        %1513 = vmax.xlane.f32.xlu0 %v1512
        %v1514 = vpop.xlane.xlu0 %1513
        %v1515 = vmax.f32 %v1422, %v1423
        %1516 = vmax.xlane.f32.xlu0 %v1515
        %v1517 = vpop.xlane.xlu0 %1516
        %v1518 = vmax.f32 %v1424, %v1425
        %1519 = vmax.xlane.f32.xlu0 %v1518
        %v1520 = vpop.xlane.xlu0 %1519
        %v1521 = vmax.f32 %v1426, %v1427
        %1522 = vmax.xlane.f32.xlu0 %v1521
        %v1523 = vpop.xlane.xlu0 %1522
        %v1524 = vsub.f32 %v1364, %v1430
        %v1525 = vsub.f32 %v1365, %v1430
        %v1526 = vsub.f32 %v1366, %v1433
        %v1527 = vsub.f32 %v1367, %v1433
        %v1528 = vsub.f32 %v1368, %v1436
        %v1529 = vsub.f32 %v1369, %v1436
        %v1530 = vsub.f32 %v1370, %v1439
        %v1531 = vsub.f32 %v1371, %v1439
        %v1532 = vsub.f32 %v1372, %v1442
        %v1533 = vsub.f32 %v1373, %v1442
        %v1534 = vsub.f32 %v1374, %v1445
        %v1535 = vsub.f32 %v1375, %v1445
        %v1536 = vsub.f32 %v1376, %v1448
        %v1537 = vsub.f32 %v1377, %v1448
        %v1538 = vsub.f32 %v1378, %v1451
        %v1539 = vsub.f32 %v1379, %v1451
        %v1540 = vsub.f32 %v1380, %v1454
        %v1541 = vsub.f32 %v1381, %v1454
        %v1542 = vsub.f32 %v1382, %v1457
        %v1543 = vsub.f32 %v1383, %v1457
        %v1544 = vsub.f32 %v1384, %v1460
        %v1545 = vsub.f32 %v1385, %v1460
        %v1546 = vsub.f32 %v1386, %v1463
        %v1547 = vsub.f32 %v1387, %v1463
        %v1548 = vsub.f32 %v1388, %v1466
        %v1549 = vsub.f32 %v1389, %v1466
        %v1550 = vsub.f32 %v1390, %v1469
        %v1551 = vsub.f32 %v1391, %v1469
        %v1552 = vsub.f32 %v1392, %v1472
        %v1553 = vsub.f32 %v1393, %v1472
        %v1554 = vsub.f32 %v1394, %v1475
        %v1555 = vsub.f32 %v1395, %v1475
        %v1556 = vsub.f32 %v1396, %v1478
        %v1557 = vsub.f32 %v1397, %v1478
        %v1558 = vsub.f32 %v1398, %v1481
        %v1559 = vsub.f32 %v1399, %v1481
        %v1560 = vsub.f32 %v1400, %v1484
        %v1561 = vsub.f32 %v1401, %v1484
        %v1562 = vsub.f32 %v1402, %v1487
        %v1563 = vsub.f32 %v1403, %v1487
        %v1564 = vsub.f32 %v1404, %v1490
        %v1565 = vsub.f32 %v1405, %v1490
        %v1566 = vsub.f32 %v1406, %v1493
        %v1567 = vsub.f32 %v1407, %v1493
        %v1568 = vsub.f32 %v1408, %v1496
        %v1569 = vsub.f32 %v1409, %v1496
        %v1570 = vsub.f32 %v1410, %v1499
        %v1571 = vsub.f32 %v1411, %v1499
        %v1572 = vsub.f32 %v1412, %v1502
        %v1573 = vsub.f32 %v1413, %v1502
        %v1574 = vsub.f32 %v1414, %v1505
        %v1575 = vsub.f32 %v1415, %v1505
        %v1576 = vsub.f32 %v1416, %v1508
        %v1577 = vsub.f32 %v1417, %v1508
        %v1578 = vsub.f32 %v1418, %v1511
        %v1579 = vsub.f32 %v1419, %v1511
        %v1580 = vsub.f32 %v1420, %v1514
        %v1581 = vsub.f32 %v1421, %v1514
        %v1582 = vsub.f32 %v1422, %v1517
        %v1583 = vsub.f32 %v1423, %v1517
        %v1584 = vsub.f32 %v1424, %v1520
        %v1585 = vsub.f32 %v1425, %v1520
        %v1586 = vsub.f32 %v1426, %v1523
        %v1587 = vsub.f32 %v1427, %v1523
        %v1588 = vmul.f32 %v1524, 1.442695
        %v1589 = vpow.pop %v1588
        %v1590 = vmul.f32 %v1525, 1.442695
        %v1591 = vpow.pop %v1590
        %v1592 = vmul.f32 %v1526, 1.442695
        %v1593 = vpow.pop %v1592
        %v1594 = vmul.f32 %v1527, 1.442695
        %v1595 = vpow.pop %v1594
        %v1596 = vmul.f32 %v1528, 1.442695
        %v1597 = vpow.pop %v1596
        %v1598 = vmul.f32 %v1529, 1.442695
        %v1599 = vpow.pop %v1598
        %v1600 = vmul.f32 %v1530, 1.442695
        %v1601 = vpow.pop %v1600
        %v1602 = vmul.f32 %v1531, 1.442695
        %v1603 = vpow.pop %v1602
        %v1604 = vmul.f32 %v1532, 1.442695
        %v1605 = vpow.pop %v1604
        %v1606 = vmul.f32 %v1533, 1.442695
        %v1607 = vpow.pop %v1606
        %v1608 = vmul.f32 %v1534, 1.442695
        %v1609 = vpow.pop %v1608
        %v1610 = vmul.f32 %v1535, 1.442695
        %v1611 = vpow.pop %v1610
        %v1612 = vmul.f32 %v1536, 1.442695
        %v1613 = vpow.pop %v1612
        %v1614 = vmul.f32 %v1537, 1.442695
        %v1615 = vpow.pop %v1614
        %v1616 = vmul.f32 %v1538, 1.442695
        %v1617 = vpow.pop %v1616
        %v1618 = vmul.f32 %v1539, 1.442695
        %v1619 = vpow.pop %v1618
        %v1620 = vmul.f32 %v1540, 1.442695
        %v1621 = vpow.pop %v1620
        %v1622 = vmul.f32 %v1541, 1.442695
        %v1623 = vpow.pop %v1622
        %v1624 = vmul.f32 %v1542, 1.442695
        %v1625 = vpow.pop %v1624
        %v1626 = vmul.f32 %v1543, 1.442695
        %v1627 = vpow.pop %v1626
        %v1628 = vmul.f32 %v1544, 1.442695
        %v1629 = vpow.pop %v1628
        %v1630 = vmul.f32 %v1545, 1.442695
        %v1631 = vpow.pop %v1630
        %v1632 = vmul.f32 %v1546, 1.442695
        %v1633 = vpow.pop %v1632
        %v1634 = vmul.f32 %v1547, 1.442695
        %v1635 = vpow.pop %v1634
        %v1636 = vmul.f32 %v1548, 1.442695
        %v1637 = vpow.pop %v1636
        %v1638 = vmul.f32 %v1549, 1.442695
        %v1639 = vpow.pop %v1638
        %v1640 = vmul.f32 %v1550, 1.442695
        %v1641 = vpow.pop %v1640
        %v1642 = vmul.f32 %v1551, 1.442695
        %v1643 = vpow.pop %v1642
        %v1644 = vmul.f32 %v1552, 1.442695
        %v1645 = vpow.pop %v1644
        %v1646 = vmul.f32 %v1553, 1.442695
        %v1647 = vpow.pop %v1646
        %v1648 = vmul.f32 %v1554, 1.442695
        %v1649 = vpow.pop %v1648
        %v1650 = vmul.f32 %v1555, 1.442695
        %v1651 = vpow.pop %v1650
        %v1652 = vmul.f32 %v1556, 1.442695
        %v1653 = vpow.pop %v1652
        %v1654 = vmul.f32 %v1557, 1.442695
        %v1655 = vpow.pop %v1654
        %v1656 = vmul.f32 %v1558, 1.442695
        %v1657 = vpow.pop %v1656
        %v1658 = vmul.f32 %v1559, 1.442695
        %v1659 = vpow.pop %v1658
        %v1660 = vmul.f32 %v1560, 1.442695
        %v1661 = vpow.pop %v1660
        %v1662 = vmul.f32 %v1561, 1.442695
        %v1663 = vpow.pop %v1662
        %v1664 = vmul.f32 %v1562, 1.442695
        %v1665 = vpow.pop %v1664
        %v1666 = vmul.f32 %v1563, 1.442695
        %v1667 = vpow.pop %v1666
        %v1668 = vmul.f32 %v1564, 1.442695
        %v1669 = vpow.pop %v1668
        %v1670 = vmul.f32 %v1565, 1.442695
        %v1671 = vpow.pop %v1670
        %v1672 = vmul.f32 %v1566, 1.442695
        %v1673 = vpow.pop %v1672
        %v1674 = vmul.f32 %v1567, 1.442695
        %v1675 = vpow.pop %v1674
        %v1676 = vmul.f32 %v1568, 1.442695
        %v1677 = vpow.pop %v1676
        %v1678 = vmul.f32 %v1569, 1.442695
        %v1679 = vpow.pop %v1678
        %v1680 = vmul.f32 %v1570, 1.442695
        %v1681 = vpow.pop %v1680
        %v1682 = vmul.f32 %v1571, 1.442695
        %v1683 = vpow.pop %v1682
        %v1684 = vmul.f32 %v1572, 1.442695
        %v1685 = vpow.pop %v1684
        %v1686 = vmul.f32 %v1573, 1.442695
        %v1687 = vpow.pop %v1686
        %v1688 = vmul.f32 %v1574, 1.442695
        %v1689 = vpow.pop %v1688
        %v1690 = vmul.f32 %v1575, 1.442695
        %v1691 = vpow.pop %v1690
        %v1692 = vmul.f32 %v1576, 1.442695
        %v1693 = vpow.pop %v1692
        %v1694 = vmul.f32 %v1577, 1.442695
        %v1695 = vpow.pop %v1694
        %v1696 = vmul.f32 %v1578, 1.442695
        %v1697 = vpow.pop %v1696
        %v1698 = vmul.f32 %v1579, 1.442695
        %v1699 = vpow.pop %v1698
        %v1700 = vmul.f32 %v1580, 1.442695
        %v1701 = vpow.pop %v1700
        %v1702 = vmul.f32 %v1581, 1.442695
        %v1703 = vpow.pop %v1702
        %v1704 = vmul.f32 %v1582, 1.442695
        %v1705 = vpow.pop %v1704
        %v1706 = vmul.f32 %v1583, 1.442695
        %v1707 = vpow.pop %v1706
        %v1708 = vmul.f32 %v1584, 1.442695
        %v1709 = vpow.pop %v1708
        %v1710 = vmul.f32 %v1585, 1.442695
        %v1711 = vpow.pop %v1710
        %v1712 = vmul.f32 %v1586, 1.442695
        %v1713 = vpow.pop %v1712
        %v1714 = vmul.f32 %v1587, 1.442695
        %v1715 = vpow.pop %v1714
        %v1716 = vadd.f32 %v1589, %v1591
        %1717 = vadd.xlane.f32.xlu0 %v1716
        %v1718 = vpop.xlane.xlu0 %1717
        %v1719 = vadd.f32 %v1593, %v1595
        %1720 = vadd.xlane.f32.xlu0 %v1719
        %v1721 = vpop.xlane.xlu0 %1720
        %v1722 = vadd.f32 %v1597, %v1599
        %1723 = vadd.xlane.f32.xlu0 %v1722
        %v1724 = vpop.xlane.xlu0 %1723
        %v1725 = vadd.f32 %v1601, %v1603
        %1726 = vadd.xlane.f32.xlu0 %v1725
        %v1727 = vpop.xlane.xlu0 %1726
        %v1728 = vadd.f32 %v1605, %v1607
        %1729 = vadd.xlane.f32.xlu0 %v1728
        %v1730 = vpop.xlane.xlu0 %1729
        %v1731 = vadd.f32 %v1609, %v1611
        %1732 = vadd.xlane.f32.xlu0 %v1731
        %v1733 = vpop.xlane.xlu0 %1732
        %v1734 = vadd.f32 %v1613, %v1615
        %1735 = vadd.xlane.f32.xlu0 %v1734
        %v1736 = vpop.xlane.xlu0 %1735
        %v1737 = vadd.f32 %v1617, %v1619
        %1738 = vadd.xlane.f32.xlu0 %v1737
        %v1739 = vpop.xlane.xlu0 %1738
        %v1740 = vadd.f32 %v1621, %v1623
        %1741 = vadd.xlane.f32.xlu0 %v1740
        %v1742 = vpop.xlane.xlu0 %1741
        %v1743 = vadd.f32 %v1625, %v1627
        %1744 = vadd.xlane.f32.xlu0 %v1743
        %v1745 = vpop.xlane.xlu0 %1744
        %v1746 = vadd.f32 %v1629, %v1631
        %1747 = vadd.xlane.f32.xlu0 %v1746
        %v1748 = vpop.xlane.xlu0 %1747
        %v1749 = vadd.f32 %v1633, %v1635
        %1750 = vadd.xlane.f32.xlu0 %v1749
        %v1751 = vpop.xlane.xlu0 %1750
        %v1752 = vadd.f32 %v1637, %v1639
        %1753 = vadd.xlane.f32.xlu0 %v1752
        %v1754 = vpop.xlane.xlu0 %1753
        %v1755 = vadd.f32 %v1641, %v1643
        %1756 = vadd.xlane.f32.xlu0 %v1755
        %v1757 = vpop.xlane.xlu0 %1756
        %v1758 = vadd.f32 %v1645, %v1647
        %1759 = vadd.xlane.f32.xlu0 %v1758
        %v1760 = vpop.xlane.xlu0 %1759
        %v1761 = vadd.f32 %v1649, %v1651
        %1762 = vadd.xlane.f32.xlu0 %v1761
        %v1763 = vpop.xlane.xlu0 %1762
        %v1764 = vadd.f32 %v1653, %v1655
        %1765 = vadd.xlane.f32.xlu0 %v1764
        %v1766 = vpop.xlane.xlu0 %1765
        %v1767 = vadd.f32 %v1657, %v1659
        %1768 = vadd.xlane.f32.xlu0 %v1767
        %v1769 = vpop.xlane.xlu0 %1768
        %v1770 = vadd.f32 %v1661, %v1663
        %1771 = vadd.xlane.f32.xlu0 %v1770
        %v1772 = vpop.xlane.xlu0 %1771
        %v1773 = vadd.f32 %v1665, %v1667
        %1774 = vadd.xlane.f32.xlu0 %v1773
        %v1775 = vpop.xlane.xlu0 %1774
        %v1776 = vadd.f32 %v1669, %v1671
        %1777 = vadd.xlane.f32.xlu0 %v1776
        %v1778 = vpop.xlane.xlu0 %1777
        %v1779 = vadd.f32 %v1673, %v1675
        %1780 = vadd.xlane.f32.xlu0 %v1779
        %v1781 = vpop.xlane.xlu0 %1780
        %v1782 = vadd.f32 %v1677, %v1679
        %1783 = vadd.xlane.f32.xlu0 %v1782
        %v1784 = vpop.xlane.xlu0 %1783
        %v1785 = vadd.f32 %v1681, %v1683
        %1786 = vadd.xlane.f32.xlu0 %v1785
        %v1787 = vpop.xlane.xlu0 %1786
        %v1788 = vadd.f32 %v1685, %v1687
        %1789 = vadd.xlane.f32.xlu0 %v1788
        %v1790 = vpop.xlane.xlu0 %1789
        %v1791 = vadd.f32 %v1689, %v1691
        %1792 = vadd.xlane.f32.xlu0 %v1791
        %v1793 = vpop.xlane.xlu0 %1792
        %v1794 = vadd.f32 %v1693, %v1695
        %1795 = vadd.xlane.f32.xlu0 %v1794
        %v1796 = vpop.xlane.xlu0 %1795
        %v1797 = vadd.f32 %v1697, %v1699
        %1798 = vadd.xlane.f32.xlu0 %v1797
        %v1799 = vpop.xlane.xlu0 %1798
        %v1800 = vadd.f32 %v1701, %v1703
        %1801 = vadd.xlane.f32.xlu0 %v1800
        %v1802 = vpop.xlane.xlu0 %1801
        %v1803 = vadd.f32 %v1705, %v1707
        %1804 = vadd.xlane.f32.xlu0 %v1803
        %v1805 = vpop.xlane.xlu0 %1804
        %v1806 = vadd.f32 %v1709, %v1711
        %1807 = vadd.xlane.f32.xlu0 %v1806
        %v1808 = vpop.xlane.xlu0 %1807
        %v1809 = vadd.f32 %v1713, %v1715
        %1810 = vadd.xlane.f32.xlu0 %v1809
        %v1811 = vpop.xlane.xlu0 %1810
        %v1812 = vpack.c.bf16 %v1593, %v1589
        %v1813 = vpack.c.bf16 %v1595, %v1591
        %v1814 = vpack.c.bf16 %v1601, %v1597
        %v1815 = vpack.c.bf16 %v1603, %v1599
        %v1816 = vpack.c.bf16 %v1609, %v1605
        %v1817 = vpack.c.bf16 %v1611, %v1607
        %v1818 = vpack.c.bf16 %v1617, %v1613
        %v1819 = vpack.c.bf16 %v1619, %v1615
        %v1820 = vpack.c.bf16 %v1625, %v1621
        %v1821 = vpack.c.bf16 %v1627, %v1623
        %v1822 = vpack.c.bf16 %v1633, %v1629
        %v1823 = vpack.c.bf16 %v1635, %v1631
        %v1824 = vpack.c.bf16 %v1641, %v1637
        %v1825 = vpack.c.bf16 %v1643, %v1639
        %v1826 = vpack.c.bf16 %v1649, %v1645
        %v1827 = vpack.c.bf16 %v1651, %v1647
        %v1828 = vpack.c.bf16 %v1657, %v1653
        %v1829 = vpack.c.bf16 %v1659, %v1655
        %v1830 = vpack.c.bf16 %v1665, %v1661
        %v1831 = vpack.c.bf16 %v1667, %v1663
        %v1832 = vpack.c.bf16 %v1673, %v1669
        %v1833 = vpack.c.bf16 %v1675, %v1671
        %v1834 = vpack.c.bf16 %v1681, %v1677
        %v1835 = vpack.c.bf16 %v1683, %v1679
        %v1836 = vpack.c.bf16 %v1689, %v1685
        %v1837 = vpack.c.bf16 %v1691, %v1687
        %v1838 = vpack.c.bf16 %v1697, %v1693
        %v1839 = vpack.c.bf16 %v1699, %v1695
        %v1840 = vpack.c.bf16 %v1705, %v1701
        %v1841 = vpack.c.bf16 %v1707, %v1703
        %v1842 = vpack.c.bf16 %v1713, %v1709
        %v1843 = vpack.c.bf16 %v1715, %v1711
        %v1844 = vpack.c.bf16 %v819, %v816
        %v1845 = vpack.c.bf16 %v827, %v824
        %v1846 = vpack.c.bf16 %v835, %v832
        %v1847 = vpack.c.bf16 %v843, %v840
        %v1848 = vpack.c.bf16 %v851, %v848
        %v1849 = vpack.c.bf16 %v859, %v856
        %v1850 = vpack.c.bf16 %v867, %v864
        %v1851 = vpack.c.bf16 %v875, %v872
        %v1852 = vpack.c.bf16 %v883, %v880
        %v1853 = vpack.c.bf16 %v891, %v888
        %v1854 = vpack.c.bf16 %v899, %v896
        %v1855 = vpack.c.bf16 %v907, %v904
        %v1856 = vpack.c.bf16 %v915, %v912
        %v1857 = vpack.c.bf16 %v923, %v920
        %v1858 = vpack.c.bf16 %v931, %v928
        %v1859 = vpack.c.bf16 %v939, %v936
        %1860 = vmatprep.subr.bf16.mxu0 0
        %1861 = vmatpush1.bf16.msra.mxu0 %v1851
        %1862 = vmatprep.subr.bf16.mxu0 0
        %1863 = vmatpush1.bf16.msra.mxu0 %v1850
        %1864 = vmatprep.subr.bf16.mxu0 0
        %1865 = vmatpush1.bf16.msra.mxu0 %v1849
        %1866 = vmatprep.subr.bf16.mxu0 0
        %1867 = vmatpush1.bf16.msra.mxu0 %v1848
        %1868 = vmatprep.subr.bf16.mxu0 0
        %1869 = vmatpush1.bf16.msra.mxu0 %v1847
        %1870 = vmatprep.subr.bf16.mxu0 0
        %1871 = vmatpush1.bf16.msra.mxu0 %v1846
        %1872 = vmatprep.subr.bf16.mxu0 0
        %1873 = vmatpush1.bf16.msra.mxu0 %v1845
        %1874 = vmatprep.subr.bf16.mxu0 0
        %1875 = vmatpush1.bf16.msra.mxu0 %v1844
        %1876 = vmatprep.subr.bf16.mxu0 0
        %1877 = vmatpush2.bf16.msra.mxu0 %v1859
        %1878 = vmatprep.subr.bf16.mxu0 0
        %1879 = vmatpush2.bf16.msra.mxu0 %v1858
        %1880 = vmatprep.subr.bf16.mxu0 0
        %1881 = vmatpush2.bf16.msra.mxu0 %v1857
        %1882 = vmatprep.subr.bf16.mxu0 0
        %1883 = vmatpush2.bf16.msra.mxu0 %v1856
        %1884 = vmatprep.subr.bf16.mxu0 0
        %1885 = vmatpush2.bf16.msra.mxu0 %v1855
        %1886 = vmatprep.subr.bf16.mxu0 0
        %1887 = vmatpush2.bf16.msra.mxu0 %v1854
        %1888 = vmatprep.subr.bf16.mxu0 0
        %1889 = vmatpush2.bf16.msra.mxu0 %v1853
        %1890 = vmatprep.subr.bf16.mxu0 0
        %1891 = vmatpush2.bf16.msra.mxu0 %v1852
        %1892 = vmatprep.mubr.bf16.mxu0 %v1813
        %1893 = vmatmul.mubr.bf16.gmra.mxu0 %v1812
        %v1894 = vpop.f32.mrf.mxu0
        %v1895 = vadd.f32 0.0, %v1894
        %v1896 = vpop.f32.mrf.mxu0
        %v1897 = vpop.f32.mrf.mxu0
        %v1898 = vadd.f32 0.0, %v1897
        %v1899 = vpop.f32.mrf.mxu0
        %1900 = vmatprep.mubr.bf16.mxu0 %v1815
        %1901 = vmatmul.mubr.bf16.gmra.mxu0 %v1814
        %v1902 = vpop.f32.mrf.mxu0
        %v1903 = vadd.f32 0.0, %v1902
        %v1904 = vpop.f32.mrf.mxu0
        %v1905 = vpop.f32.mrf.mxu0
        %v1906 = vadd.f32 0.0, %v1905
        %v1907 = vpop.f32.mrf.mxu0
        %1908 = vmatprep.mubr.bf16.mxu0 %v1817
        %1909 = vmatmul.mubr.bf16.gmra.mxu0 %v1816
        %v1910 = vpop.f32.mrf.mxu0
        %v1911 = vadd.f32 0.0, %v1910
        %v1912 = vpop.f32.mrf.mxu0
        %v1913 = vpop.f32.mrf.mxu0
        %v1914 = vadd.f32 0.0, %v1913
        %v1915 = vpop.f32.mrf.mxu0
        %1916 = vmatprep.mubr.bf16.mxu0 %v1819
        %1917 = vmatmul.mubr.bf16.gmra.mxu0 %v1818
        %v1918 = vpop.f32.mrf.mxu0
        %v1919 = vadd.f32 0.0, %v1918
        %v1920 = vpop.f32.mrf.mxu0
        %v1921 = vpop.f32.mrf.mxu0
        %v1922 = vadd.f32 0.0, %v1921
        %v1923 = vpop.f32.mrf.mxu0
        %1924 = vmatprep.mubr.bf16.mxu0 %v1821
        %1925 = vmatmul.mubr.bf16.gmra.mxu0 %v1820
        %v1926 = vpop.f32.mrf.mxu0
        %v1927 = vadd.f32 0.0, %v1926
        %v1928 = vpop.f32.mrf.mxu0
        %v1929 = vpop.f32.mrf.mxu0
        %v1930 = vadd.f32 0.0, %v1929
        %v1931 = vpop.f32.mrf.mxu0
        %1932 = vmatprep.mubr.bf16.mxu0 %v1823
        %1933 = vmatmul.mubr.bf16.gmra.mxu0 %v1822
        %v1934 = vpop.f32.mrf.mxu0
        %v1935 = vadd.f32 0.0, %v1934
        %v1936 = vpop.f32.mrf.mxu0
        %v1937 = vpop.f32.mrf.mxu0
        %v1938 = vadd.f32 0.0, %v1937
        %v1939 = vpop.f32.mrf.mxu0
        %1940 = vmatprep.mubr.bf16.mxu0 %v1825
        %1941 = vmatmul.mubr.bf16.gmra.mxu0 %v1824
        %v1942 = vpop.f32.mrf.mxu0
        %v1943 = vadd.f32 0.0, %v1942
        %v1944 = vpop.f32.mrf.mxu0
        %v1945 = vpop.f32.mrf.mxu0
        %v1946 = vadd.f32 0.0, %v1945
        %v1947 = vpop.f32.mrf.mxu0
        %1948 = vmatprep.mubr.bf16.mxu0 %v1827
        %1949 = vmatmul.mubr.bf16.gmra.mxu0 %v1826
        %v1950 = vpop.f32.mrf.mxu0
        %v1951 = vadd.f32 0.0, %v1950
        %v1952 = vpop.f32.mrf.mxu0
        %v1953 = vpop.f32.mrf.mxu0
        %v1954 = vadd.f32 0.0, %v1953
        %v1955 = vpop.f32.mrf.mxu0
        %1956 = vmatprep.mubr.bf16.mxu0 %v1829
        %1957 = vmatmul.mubr.bf16.gmra.mxu0 %v1828
        %v1958 = vpop.f32.mrf.mxu0
        %v1959 = vadd.f32 0.0, %v1958
        %v1960 = vpop.f32.mrf.mxu0
        %v1961 = vpop.f32.mrf.mxu0
        %v1962 = vadd.f32 0.0, %v1961
        %v1963 = vpop.f32.mrf.mxu0
        %1964 = vmatprep.mubr.bf16.mxu0 %v1831
        %1965 = vmatmul.mubr.bf16.gmra.mxu0 %v1830
        %v1966 = vpop.f32.mrf.mxu0
        %v1967 = vadd.f32 0.0, %v1966
        %v1968 = vpop.f32.mrf.mxu0
        %v1969 = vpop.f32.mrf.mxu0
        %v1970 = vadd.f32 0.0, %v1969
        %v1971 = vpop.f32.mrf.mxu0
        %1972 = vmatprep.mubr.bf16.mxu0 %v1833
        %1973 = vmatmul.mubr.bf16.gmra.mxu0 %v1832
        %v1974 = vpop.f32.mrf.mxu0
        %v1975 = vadd.f32 0.0, %v1974
        %v1976 = vpop.f32.mrf.mxu0
        %v1977 = vpop.f32.mrf.mxu0
        %v1978 = vadd.f32 0.0, %v1977
        %v1979 = vpop.f32.mrf.mxu0
        %1980 = vmatprep.mubr.bf16.mxu0 %v1835
        %1981 = vmatmul.mubr.bf16.gmra.mxu0 %v1834
        %v1982 = vpop.f32.mrf.mxu0
        %v1983 = vadd.f32 0.0, %v1982
        %v1984 = vpop.f32.mrf.mxu0
        %v1985 = vpop.f32.mrf.mxu0
        %v1986 = vadd.f32 0.0, %v1985
        %v1987 = vpop.f32.mrf.mxu0
        %1988 = vmatprep.mubr.bf16.mxu0 %v1837
        %1989 = vmatmul.mubr.bf16.gmra.mxu0 %v1836
        %v1990 = vpop.f32.mrf.mxu0
        %v1991 = vadd.f32 0.0, %v1990
        %v1992 = vpop.f32.mrf.mxu0
        %v1993 = vpop.f32.mrf.mxu0
        %v1994 = vadd.f32 0.0, %v1993
        %v1995 = vpop.f32.mrf.mxu0
        %1996 = vmatprep.mubr.bf16.mxu0 %v1839
        %1997 = vmatmul.mubr.bf16.gmra.mxu0 %v1838
        %v1998 = vpop.f32.mrf.mxu0
        %v1999 = vadd.f32 0.0, %v1998
        %v2000 = vpop.f32.mrf.mxu0
        %v2001 = vpop.f32.mrf.mxu0
        %v2002 = vadd.f32 0.0, %v2001
        %v2003 = vpop.f32.mrf.mxu0
        %2004 = vmatprep.mubr.bf16.mxu0 %v1841
        %2005 = vmatmul.mubr.bf16.gmra.mxu0 %v1840
        %v2006 = vpop.f32.mrf.mxu0
        %v2007 = vadd.f32 0.0, %v2006
        %v2008 = vpop.f32.mrf.mxu0
        %v2009 = vpop.f32.mrf.mxu0
        %v2010 = vadd.f32 0.0, %v2009
        %v2011 = vpop.f32.mrf.mxu0
        %2012 = vmatprep.mubr.bf16.mxu0 %v1843
        %2013 = vmatmul.mubr.bf16.gmra.mxu0 %v1842
        %v2014 = vpop.f32.mrf.mxu0
        %v2015 = vadd.f32 0.0, %v2014
        %v2016 = vpop.f32.mrf.mxu0
        %v2017 = vpop.f32.mrf.mxu0
        %v2018 = vadd.f32 0.0, %v2017
        %v2019 = vpop.f32.mrf.mxu0
        %2020 = vdwg.mxu0
        %v2021 = vrcp.pop %v1718
        %v2022 = vmul.f32 %v1895, %v2021
        %v2023 = vrcp.pop %v1721
        %v2024 = vmul.f32 %v1898, %v2023
        %v2025 = vrcp.pop %v1724
        %v2026 = vmul.f32 %v1903, %v2025
        %v2027 = vrcp.pop %v1727
        %v2028 = vmul.f32 %v1906, %v2027
        %v2029 = vrcp.pop %v1730
        %v2030 = vmul.f32 %v1911, %v2029
        %v2031 = vrcp.pop %v1733
        %v2032 = vmul.f32 %v1914, %v2031
        %v2033 = vrcp.pop %v1736
        %v2034 = vmul.f32 %v1919, %v2033
        %v2035 = vrcp.pop %v1739
        %v2036 = vmul.f32 %v1922, %v2035
        %v2037 = vrcp.pop %v1742
        %v2038 = vmul.f32 %v1927, %v2037
        %v2039 = vrcp.pop %v1745
        %v2040 = vmul.f32 %v1930, %v2039
        %v2041 = vrcp.pop %v1748
        %v2042 = vmul.f32 %v1935, %v2041
        %v2043 = vrcp.pop %v1751
        %v2044 = vmul.f32 %v1938, %v2043
        %v2045 = vrcp.pop %v1754
        %v2046 = vmul.f32 %v1943, %v2045
        %v2047 = vrcp.pop %v1757
        %v2048 = vmul.f32 %v1946, %v2047
        %v2049 = vrcp.pop %v1760
        %v2050 = vmul.f32 %v1951, %v2049
        %v2051 = vrcp.pop %v1763
        %v2052 = vmul.f32 %v1954, %v2051
        %v2053 = vrcp.pop %v1766
        %v2054 = vmul.f32 %v1959, %v2053
        %v2055 = vrcp.pop %v1769
        %v2056 = vmul.f32 %v1962, %v2055
        %v2057 = vrcp.pop %v1772
        %v2058 = vmul.f32 %v1967, %v2057
        %v2059 = vrcp.pop %v1775
        %v2060 = vmul.f32 %v1970, %v2059
        %v2061 = vrcp.pop %v1778
        %v2062 = vmul.f32 %v1975, %v2061
        %v2063 = vrcp.pop %v1781
        %v2064 = vmul.f32 %v1978, %v2063
        %v2065 = vrcp.pop %v1784
        %v2066 = vmul.f32 %v1983, %v2065
        %v2067 = vrcp.pop %v1787
        %v2068 = vmul.f32 %v1986, %v2067
        %v2069 = vrcp.pop %v1790
        %v2070 = vmul.f32 %v1991, %v2069
        %v2071 = vrcp.pop %v1793
        %v2072 = vmul.f32 %v1994, %v2071
        %v2073 = vrcp.pop %v1796
        %v2074 = vmul.f32 %v1999, %v2073
        %v2075 = vrcp.pop %v1799
        %v2076 = vmul.f32 %v2002, %v2075
        %v2077 = vrcp.pop %v1802
        %v2078 = vmul.f32 %v2007, %v2077
        %v2079 = vrcp.pop %v1805
        %v2080 = vmul.f32 %v2010, %v2079
        %v2081 = vrcp.pop %v1808
        %v2082 = vmul.f32 %v2015, %v2081
        %v2083 = vrcp.pop %v1811
        %v2084 = vmul.f32 %v2018, %v2083
        %2085 = vst.msk [vmem:[%s217] sm:$0xff] %vm974, %v2022
        %2086 = vst.msk [vmem:[%s217 + $0x8] sm:$0xff] %vm974, %v2024
        %2087 = vst.msk [vmem:[%s217 + $0x10] sm:$0xff] %vm974, %v2026
        %2088 = vst.msk [vmem:[%s217 + $0x18] sm:$0xff] %vm974, %v2028
        %2089 = vst.msk [vmem:[%s217 + $0x20] sm:$0xff] %vm974, %v2030
        %2090 = vst.msk [vmem:[%s217 + $0x28] sm:$0xff] %vm974, %v2032
        %2091 = vst.msk [vmem:[%s217 + $0x30] sm:$0xff] %vm974, %v2034
        %2092 = vst.msk [vmem:[%s217 + $0x38] sm:$0xff] %vm974, %v2036
        %2093 = vst.msk [vmem:[%s217 + $0x40] sm:$0xff] %vm974, %v2038
        %2094 = vst.msk [vmem:[%s217 + $0x48] sm:$0xff] %vm974, %v2040
        %2095 = vst.msk [vmem:[%s217 + $0x50] sm:$0xff] %vm974, %v2042
        %2096 = vst.msk [vmem:[%s217 + $0x58] sm:$0xff] %vm974, %v2044
        %2097 = vst.msk [vmem:[%s217 + $0x60] sm:$0xff] %vm974, %v2046
        %2098 = vst.msk [vmem:[%s217 + $0x68] sm:$0xff] %vm974, %v2048
        %2099 = vst.msk [vmem:[%s217 + $0x70] sm:$0xff] %vm974, %v2050
        %2100 = vst.msk [vmem:[%s217 + $0x78] sm:$0xff] %vm974, %v2052
        %2101 = vst.msk [vmem:[%s217 + $0x80] sm:$0xff] %vm974, %v2054
        %2102 = vst.msk [vmem:[%s217 + $0x88] sm:$0xff] %vm974, %v2056
        %2103 = vst.msk [vmem:[%s217 + $0x90] sm:$0xff] %vm974, %v2058
        %2104 = vst.msk [vmem:[%s217 + $0x98] sm:$0xff] %vm974, %v2060
        %2105 = vst.msk [vmem:[%s217 + $0xa0] sm:$0xff] %vm974, %v2062
        %2106 = vst.msk [vmem:[%s217 + $0xa8] sm:$0xff] %vm974, %v2064
        %2107 = vst.msk [vmem:[%s217 + $0xb0] sm:$0xff] %vm974, %v2066
        %2108 = vst.msk [vmem:[%s217 + $0xb8] sm:$0xff] %vm974, %v2068
        %2109 = vst.msk [vmem:[%s217 + $0xc0] sm:$0xff] %vm974, %v2070
        %2110 = vst.msk [vmem:[%s217 + $0xc8] sm:$0xff] %vm974, %v2072
        %2111 = vst.msk [vmem:[%s217 + $0xd0] sm:$0xff] %vm974, %v2074
        %2112 = vst.msk [vmem:[%s217 + $0xd8] sm:$0xff] %vm974, %v2076
        %2113 = vst.msk [vmem:[%s217 + $0xe0] sm:$0xff] %vm974, %v2078
        %2114 = vst.msk [vmem:[%s217 + $0xe8] sm:$0xff] %vm974, %v2080
        %2115 = vst.msk [vmem:[%s217 + $0xf0] sm:$0xff] %vm974, %v2082
        %2116 = vst.msk [vmem:[%s217 + $0xf8] sm:$0xff] %vm974, %v2084
        %p2117 = scmp.lt.s32.totalorder %s18, 1
        %s2118 = scalar_select %p2117, %s18, 1
        %s2119 = smul.addr %s2118, 32
        %s2120 = smul.addr %s2119, 8
        %s2121 = scalar_lea.vmem %s4, %s2120
        // Predicated region
        $region41: #{tpu_custom_call.1} parent=35 // pred_check
          %p2122 = pneg %p125
        $region42: #{tpu_custom_call.1} parent=35 // pred_check_branch
          %2124 = sbr.rel (%p2122) target = $region44
        $region43: #{tpu_custom_call.1} parent=35 // pred_region
          _
        $region44: #{tpu_custom_call.1} parent=35 // pred_fallthru
          _
      $region36: #{tpu_custom_call.1} parent=5 // pred_fallthru
        _
      %p2125 = scmp.le.s32.totalorder 2, %s13
      // Predicated region
      $region45: #{tpu_custom_call.1} parent=5 // pred_check
        %p2126 = pneg %p2125
      $region46: #{tpu_custom_call.1} parent=5 // pred_check_branch
        %2128 = sbr.rel (%p2126) target = $region48
      $region47: #{tpu_custom_call.1} parent=5 // pred_region
        %s2129 = ssub.s32 %s13, 2
        // Predicated region
        $region49: #{tpu_custom_call.1} parent=47 // pred_check
          %p2130 = pneg %p131
        $region50: #{tpu_custom_call.1} parent=47 // pred_check_branch
          %2132 = sbr.rel (%p2130) target = $region52
        $region51: #{tpu_custom_call.1} parent=47 // pred_region
          %p2133 = scmp.lt.s32.totalorder %s19, 1
          %s2134 = scalar_select %p2133, %s19, 1
          %s2135 = smul.addr %s2134, 32
          %s2136 = smul.addr %s2135, 8
          %s2137 = scalar_lea.vmem %s4, %s2136
        $region52: #{tpu_custom_call.1} parent=47 // pred_fallthru
          _
      $region48: #{tpu_custom_call.1} parent=5 // pred_fallthru
        _
    $region6: #{tpu_custom_call.1} parent=1 // loop_footer
      %s17 = sadd.s32 1, %s13
    $region7: #{tpu_custom_call.1} parent=1 // loop_footer_branch
      %12 = sbr.rel target = $region3
    $region8: #{tpu_custom_call.1} parent=1 // loop_exit
      _
    %2138 = vsyncpa [#allocation3], 1
    %s2139 = scalar_lea.sflag [#allocation3], 1
    %2140 = vsyncpa %s2139, 1

</llo_original>
